<compile_context>
chip_gen: v7x
topology: tpu7x:2x2x1
jax: 0.10.0
libtpu: 0.0.40
codegen_flags: <defaults>
</compile_context>

<pallas_src>
import jax
import jax.numpy as jnp
from jax.experimental import pallas as pl
from jax.experimental.pallas import tpu as pltpu


def _round_up(n, m):
    return ((n + m - 1) // m) * m


def _mlp_kernel(x_ref,
                w1_ref, b1_ref,
                w2_ref, b2_ref,
                w3_ref, b3_ref,
                w4_ref, b4_ref,
                w5_ref, b5_ref,
                o_ref):
    """Fused forward pass of the whole MLP for one (features, batch) tile."""

    def linear(h_bf16, w_ref, b_ref):
        # W: (d_out, d_in) bf16, h: (d_in, BB) bf16 -> (d_out, BB) f32 accum.
        return (jnp.dot(w_ref[...], h_bf16, preferred_element_type=jnp.float32)
                + b_ref[...])

    def sigmoid(z_f32):
        # EUP-routed sigmoid: tanh is a single EUP op; avoids the VALU divide.
        return 0.5 * (jnp.tanh(0.5 * z_f32) + 1.0)

    h = x_ref[...]  # bf16 (in_dim, BB), batch on lanes
    for w_ref, b_ref in ((w1_ref, b1_ref), (w2_ref, b2_ref),
                         (w3_ref, b3_ref), (w4_ref, b4_ref)):
        h = sigmoid(linear(h, w_ref, b_ref)).astype(jnp.bfloat16)
    # Final layer: no activation (matches nn.Sequential ending in nn.Linear).
    o_ref[...] = linear(h, w5_ref, b5_ref).astype(o_ref.dtype)


def dnn_forward(x, params, *, block_batch=None, max_block_batch=4096):
    """Run the fused Pallas MLP kernel.

    x:      (B, input_size) float32
    params: list of (W, b) pairs in PyTorch layout: W (d_out, d_in), b (d_out,)
    Returns (B, output_size) float32.
    """
    B, in_dim = x.shape
    out_dim = params[-1][0].shape[0]

    # VMEM-aware batch tile: multiple of 128 (batch sits on the lane axis),
    # capped so f32 intermediates (~128 x BB x 4 B) stay well under the scoped
    # VMEM limit on every chip generation (incl. v7x's 64 MiB physical VMEM).
    if block_batch is None:
        block_batch = min(max_block_batch, _round_up(B, 128))
    block_batch = max(128, _round_up(block_batch, 128))
    B_pad = _round_up(B, block_batch)
    grid = (B_pad // block_batch,)

    # Transposed, zero-padded, bf16 input: (in_dim, B_pad) with batch on lanes.
    x_t = jnp.zeros((in_dim, B_pad), dtype=jnp.bfloat16)
    x_t = x_t.at[:, :B].set(x.astype(jnp.bfloat16).T)

    in_specs = [pl.BlockSpec((in_dim, block_batch), lambda i: (0, i))]
    flat_args = [x_t]
    for w, b in params:
        d_out, d_in = w.shape
        # Weights / biases are tiny: every grid step sees the full matrix
        # (constant index map => DMA'd once, re-used across the grid).
        in_specs.append(pl.BlockSpec((d_out, d_in), lambda i: (0, 0)))
        in_specs.append(pl.BlockSpec((d_out, 1), lambda i: (0, 0)))
        flat_args.append(w.astype(jnp.bfloat16))           # bf16 MXU operand
        flat_args.append(b.reshape(d_out, 1).astype(jnp.float32))  # f32 bias

    out_spec = pl.BlockSpec((out_dim, block_batch), lambda i: (0, i))

    out_t = pl.pallas_call(
        _mlp_kernel,
        out_shape=jax.ShapeDtypeStruct((out_dim, B_pad), jnp.float32),
        grid_spec=pltpu.PrefetchScalarGridSpec(
            num_scalar_prefetch=0,
            grid=grid,
            in_specs=in_specs,
            out_specs=out_spec,
        ),
        compiler_params=pltpu.CompilerParams(
            dimension_semantics=("parallel",),
            vmem_limit_bytes=32 * 1024 * 1024,
        ),
    )(*flat_args)

    # Back to (B, out_dim), dropping batch padding.
    return out_t.T[:B]


def make_params(key, input_size, output_size):
    """Deterministic Xavier-normal weights, zero biases (mirrors _initialize_weights).

    Weights are kept in the PyTorch nn.Linear layout: (d_out, d_in).
    """
    a = input_size
    dims = [(input_size, 2 * a),
            (2 * a, 2 * a),
            (2 * a, 4 * a),
            (4 * a, 4 * a),
            (4 * a, output_size)]
    params = []
    for d_in, d_out in dims:
        key, sub = jax.random.split(key)
        std = (2.0 / (d_in + d_out)) ** 0.5  # xavier_normal_ gain=1
        w = std * jax.random.normal(sub, (d_out, d_in), dtype=jnp.float32)
        b = jnp.zeros((d_out,), dtype=jnp.float32)
        params.append((w, b))
    return params


def dnn_forward_ref(x, params):
    """Pure-JAX f32 reference for correctness checking."""
    h = x
    for i, (w, b) in enumerate(params):
        h = h @ w.T + b
        if i < len(params) - 1:
            h = jax.nn.sigmoid(h)
    return h


if __name__ == "__main__":
    key = jax.random.PRNGKey(0)
    input_size = 32          # -> hidden sizes 64, 64, 128, 128
    output_size = 1
    batch = 300              # deliberately not a multiple of 128: exercises padding

    key, kx = jax.random.split(key)
    x = jax.random.normal(kx, (batch, input_size), dtype=jnp.float32)
    params = make_params(key, input_size, output_size)

    # block_batch=128 -> grid of 3 pipelined batch tiles at this small size;
    # defaults scale the tile up (multiple of 128, capped) for large batches.
    out = dnn_forward(x, params, block_batch=128)
    out = jax.block_until_ready(out)

    ref = dnn_forward_ref(x, params)
    assert out.shape == (batch, output_size)
    max_err = float(jnp.max(jnp.abs(out - ref)))
    # bf16 MXU operands => compare against the f32 reference with loose tolerance.
    assert max_err < 5e-2, f"mismatch vs reference: max abs err {max_err}"

    print("KERNEL_OK")
</pallas_src>

<mosaic_0001>
module attributes {stable_mosaic.version = 11 : i64} {
  func.func @_mlp_kernel(%arg0: i32, %arg1: memref<32x128xbf16, #tpu.memory_space<vmem>>, %arg2: memref<64x32xbf16, #tpu.memory_space<vmem>>, %arg3: memref<64x1xf32, #tpu.memory_space<vmem>>, %arg4: memref<64x64xbf16, #tpu.memory_space<vmem>>, %arg5: memref<64x1xf32, #tpu.memory_space<vmem>>, %arg6: memref<128x64xbf16, #tpu.memory_space<vmem>>, %arg7: memref<128x1xf32, #tpu.memory_space<vmem>>, %arg8: memref<128x128xbf16, #tpu.memory_space<vmem>>, %arg9: memref<128x1xf32, #tpu.memory_space<vmem>>, %arg10: memref<1x128xbf16, #tpu.memory_space<vmem>>, %arg11: memref<1x1xf32, #tpu.memory_space<vmem>>, %arg12: memref<1x128xf32, #tpu.memory_space<vmem>>) attributes {dimension_semantics = [#tpu.dimension_semantics<parallel>], iteration_bounds = array<i64: 3>, scalar_prefetch = 0 : i64, scratch_operands = 0 : i64, tpu.core_type = #tpu.core_type<tc>, window_params = [{transform_indices = @transform_0, window_bounds = array<i64: 32, 128>}, {pipeline_mode = #tpu.pipeline_mode<synchronous>, transform_indices = @transform_1, window_bounds = array<i64: 64, 32>}, {pipeline_mode = #tpu.pipeline_mode<synchronous>, transform_indices = @transform_2, window_bounds = array<i64: 64, 1>}, {pipeline_mode = #tpu.pipeline_mode<synchronous>, transform_indices = @transform_3, window_bounds = array<i64: 64, 64>}, {pipeline_mode = #tpu.pipeline_mode<synchronous>, transform_indices = @transform_4, window_bounds = array<i64: 64, 1>}, {pipeline_mode = #tpu.pipeline_mode<synchronous>, transform_indices = @transform_5, window_bounds = array<i64: 128, 64>}, {pipeline_mode = #tpu.pipeline_mode<synchronous>, transform_indices = @transform_6, window_bounds = array<i64: 128, 1>}, {pipeline_mode = #tpu.pipeline_mode<synchronous>, transform_indices = @transform_7, window_bounds = array<i64: 128, 128>}, {pipeline_mode = #tpu.pipeline_mode<synchronous>, transform_indices = @transform_8, window_bounds = array<i64: 128, 1>}, {pipeline_mode = #tpu.pipeline_mode<synchronous>, transform_indices = @transform_9, window_bounds = array<i64: 1, 128>}, {pipeline_mode = #tpu.pipeline_mode<synchronous>, transform_indices = @transform_10, window_bounds = array<i64: 1, 1>}, {transform_indices = @transform_11, window_bounds = array<i64: 1, 128>}]} {
    %c0 = arith.constant 0 : index
    %c0_0 = arith.constant 0 : index
    %0 = vector.load %arg1[%c0, %c0_0] : memref<32x128xbf16, #tpu.memory_space<vmem>>, vector<32x128xbf16>
    %c0_1 = arith.constant 0 : index
    %c0_2 = arith.constant 0 : index
    %1 = vector.load %arg2[%c0_1, %c0_2] : memref<64x32xbf16, #tpu.memory_space<vmem>>, vector<64x32xbf16>
    %cst = arith.constant dense<0.000000e+00> : vector<64x128xf32>
    %2 = tpu.matmul %1, %0, %cst {dimension_numbers = #tpu.dot_dimension_numbers<[1], [0], [0], [1], [0, 0, 1, 1], [], []>} : vector<64x32xbf16>, vector<32x128xbf16>, vector<64x128xf32> -> vector<64x128xf32>
    %c0_3 = arith.constant 0 : index
    %c0_4 = arith.constant 0 : index
    %3 = vector.load %arg3[%c0_3, %c0_4] : memref<64x1xf32, #tpu.memory_space<vmem>>, vector<64x1xf32>
    %4 = vector.broadcast %3 : vector<64x1xf32> to vector<64x128xf32>
    %5 = arith.addf %2, %4 : vector<64x128xf32>
    %cst_5 = arith.constant 5.000000e-01 : f32
    %6 = vector.broadcast %cst_5 : f32 to vector<64x128xf32>
    %7 = arith.mulf %6, %5 : vector<64x128xf32>
    %8 = math.tanh %7 : vector<64x128xf32>
    %cst_6 = arith.constant 1.000000e+00 : f32
    %9 = vector.broadcast %cst_6 : f32 to vector<64x128xf32>
    %10 = arith.addf %8, %9 : vector<64x128xf32>
    %cst_7 = arith.constant 5.000000e-01 : f32
    %11 = vector.broadcast %cst_7 : f32 to vector<64x128xf32>
    %12 = arith.mulf %11, %10 : vector<64x128xf32>
    %13 = arith.truncf %12 : vector<64x128xf32> to vector<64x128xbf16>
    %c0_8 = arith.constant 0 : index
    %c0_9 = arith.constant 0 : index
    %14 = vector.load %arg4[%c0_8, %c0_9] : memref<64x64xbf16, #tpu.memory_space<vmem>>, vector<64x64xbf16>
    %cst_10 = arith.constant dense<0.000000e+00> : vector<64x128xf32>
    %15 = tpu.matmul %14, %13, %cst_10 {dimension_numbers = #tpu.dot_dimension_numbers<[1], [0], [0], [1], [0, 0, 1, 1], [], []>} : vector<64x64xbf16>, vector<64x128xbf16>, vector<64x128xf32> -> vector<64x128xf32>
    %c0_11 = arith.constant 0 : index
    %c0_12 = arith.constant 0 : index
    %16 = vector.load %arg5[%c0_11, %c0_12] : memref<64x1xf32, #tpu.memory_space<vmem>>, vector<64x1xf32>
    %17 = vector.broadcast %16 : vector<64x1xf32> to vector<64x128xf32>
    %18 = arith.addf %15, %17 : vector<64x128xf32>
    %cst_13 = arith.constant 5.000000e-01 : f32
    %19 = vector.broadcast %cst_13 : f32 to vector<64x128xf32>
    %20 = arith.mulf %19, %18 : vector<64x128xf32>
    %21 = math.tanh %20 : vector<64x128xf32>
    %cst_14 = arith.constant 1.000000e+00 : f32
    %22 = vector.broadcast %cst_14 : f32 to vector<64x128xf32>
    %23 = arith.addf %21, %22 : vector<64x128xf32>
    %cst_15 = arith.constant 5.000000e-01 : f32
    %24 = vector.broadcast %cst_15 : f32 to vector<64x128xf32>
    %25 = arith.mulf %24, %23 : vector<64x128xf32>
    %26 = arith.truncf %25 : vector<64x128xf32> to vector<64x128xbf16>
    %c0_16 = arith.constant 0 : index
    %c0_17 = arith.constant 0 : index
    %27 = vector.load %arg6[%c0_16, %c0_17] : memref<128x64xbf16, #tpu.memory_space<vmem>>, vector<128x64xbf16>
    %cst_18 = arith.constant dense<0.000000e+00> : vector<128x128xf32>
    %28 = tpu.matmul %27, %26, %cst_18 {dimension_numbers = #tpu.dot_dimension_numbers<[1], [0], [0], [1], [0, 0, 1, 1], [], []>} : vector<128x64xbf16>, vector<64x128xbf16>, vector<128x128xf32> -> vector<128x128xf32>
    %c0_19 = arith.constant 0 : index
    %c0_20 = arith.constant 0 : index
    %29 = vector.load %arg7[%c0_19, %c0_20] : memref<128x1xf32, #tpu.memory_space<vmem>>, vector<128x1xf32>
    %30 = vector.broadcast %29 : vector<128x1xf32> to vector<128x128xf32>
    %31 = arith.addf %28, %30 : vector<128x128xf32>
    %cst_21 = arith.constant 5.000000e-01 : f32
    %32 = vector.broadcast %cst_21 : f32 to vector<128x128xf32>
    %33 = arith.mulf %32, %31 : vector<128x128xf32>
    %34 = math.tanh %33 : vector<128x128xf32>
    %cst_22 = arith.constant 1.000000e+00 : f32
    %35 = vector.broadcast %cst_22 : f32 to vector<128x128xf32>
    %36 = arith.addf %34, %35 : vector<128x128xf32>
    %cst_23 = arith.constant 5.000000e-01 : f32
    %37 = vector.broadcast %cst_23 : f32 to vector<128x128xf32>
    %38 = arith.mulf %37, %36 : vector<128x128xf32>
    %39 = arith.truncf %38 : vector<128x128xf32> to vector<128x128xbf16>
    %c0_24 = arith.constant 0 : index
    %c0_25 = arith.constant 0 : index
    %40 = vector.load %arg8[%c0_24, %c0_25] : memref<128x128xbf16, #tpu.memory_space<vmem>>, vector<128x128xbf16>
    %cst_26 = arith.constant dense<0.000000e+00> : vector<128x128xf32>
    %41 = tpu.matmul %40, %39, %cst_26 {dimension_numbers = #tpu.dot_dimension_numbers<[1], [0], [0], [1], [0, 0, 1, 1], [], []>} : vector<128x128xbf16>, vector<128x128xbf16>, vector<128x128xf32> -> vector<128x128xf32>
    %c0_27 = arith.constant 0 : index
    %c0_28 = arith.constant 0 : index
    %42 = vector.load %arg9[%c0_27, %c0_28] : memref<128x1xf32, #tpu.memory_space<vmem>>, vector<128x1xf32>
    %43 = vector.broadcast %42 : vector<128x1xf32> to vector<128x128xf32>
    %44 = arith.addf %41, %43 : vector<128x128xf32>
    %cst_29 = arith.constant 5.000000e-01 : f32
    %45 = vector.broadcast %cst_29 : f32 to vector<128x128xf32>
    %46 = arith.mulf %45, %44 : vector<128x128xf32>
    %47 = math.tanh %46 : vector<128x128xf32>
    %cst_30 = arith.constant 1.000000e+00 : f32
    %48 = vector.broadcast %cst_30 : f32 to vector<128x128xf32>
    %49 = arith.addf %47, %48 : vector<128x128xf32>
    %cst_31 = arith.constant 5.000000e-01 : f32
    %50 = vector.broadcast %cst_31 : f32 to vector<128x128xf32>
    %51 = arith.mulf %50, %49 : vector<128x128xf32>
    %52 = arith.truncf %51 : vector<128x128xf32> to vector<128x128xbf16>
    %c0_32 = arith.constant 0 : index
    %c0_33 = arith.constant 0 : index
    %53 = vector.load %arg10[%c0_32, %c0_33] : memref<1x128xbf16, #tpu.memory_space<vmem>>, vector<1x128xbf16>
    %cst_34 = arith.constant dense<0.000000e+00> : vector<1x128xf32>
    %54 = tpu.matmul %53, %52, %cst_34 {dimension_numbers = #tpu.dot_dimension_numbers<[1], [0], [0], [1], [0, 0, 1, 1], [], []>} : vector<1x128xbf16>, vector<128x128xbf16>, vector<1x128xf32> -> vector<1x128xf32>
    %c0_35 = arith.constant 0 : index
    %c0_36 = arith.constant 0 : index
    %55 = vector.load %arg11[%c0_35, %c0_36] : memref<1x1xf32, #tpu.memory_space<vmem>>, vector<1x1xf32>
    %56 = vector.broadcast %55 : vector<1x1xf32> to vector<1x128xf32>
    %57 = arith.addf %54, %56 : vector<1x128xf32>
    %c0_37 = arith.constant 0 : index
    %c0_38 = arith.constant 0 : index
    %58 = vector.load %arg12[%c0_37, %c0_38] : memref<1x128xf32, #tpu.memory_space<vmem>>, vector<1x128xf32>
    tpu.vector_store %arg12[%c0_37, %c0_38], %57 {strides = array<i32>} : memref<1x128xf32, #tpu.memory_space<vmem>>, vector<1x128xf32>,
    return
  }
  func.func @transform_0(%arg0: i32) -> (i32, i32) {
    %c0_i32 = arith.constant 0 : i32
    %c0_i32_0 = arith.constant 0 : i32
    return %c0_i32, %arg0 : i32, i32
  }
  func.func @transform_1(%arg0: i32) -> (i32, i32) {
    %c0_i32 = arith.constant 0 : i32
    %c0_i32_0 = arith.constant 0 : i32
    %c0_i32_1 = arith.constant 0 : i32
    return %c0_i32, %c0_i32_0 : i32, i32
  }
  func.func @transform_2(%arg0: i32) -> (i32, i32) {
    %c0_i32 = arith.constant 0 : i32
    %c0_i32_0 = arith.constant 0 : i32
    %c0_i32_1 = arith.constant 0 : i32
    return %c0_i32, %c0_i32_0 : i32, i32
  }
  func.func @transform_3(%arg0: i32) -> (i32, i32) {
    %c0_i32 = arith.constant 0 : i32
    %c0_i32_0 = arith.constant 0 : i32
    %c0_i32_1 = arith.constant 0 : i32
    return %c0_i32, %c0_i32_0 : i32, i32
  }
  func.func @transform_4(%arg0: i32) -> (i32, i32) {
    %c0_i32 = arith.constant 0 : i32
    %c0_i32_0 = arith.constant 0 : i32
    %c0_i32_1 = arith.constant 0 : i32
    return %c0_i32, %c0_i32_0 : i32, i32
  }
  func.func @transform_5(%arg0: i32) -> (i32, i32) {
    %c0_i32 = arith.constant 0 : i32
    %c0_i32_0 = arith.constant 0 : i32
    %c0_i32_1 = arith.constant 0 : i32
    return %c0_i32, %c0_i32_0 : i32, i32
  }
  func.func @transform_6(%arg0: i32) -> (i32, i32) {
    %c0_i32 = arith.constant 0 : i32
    %c0_i32_0 = arith.constant 0 : i32
    %c0_i32_1 = arith.constant 0 : i32
    return %c0_i32, %c0_i32_0 : i32, i32
  }
  func.func @transform_7(%arg0: i32) -> (i32, i32) {
    %c0_i32 = arith.constant 0 : i32
    %c0_i32_0 = arith.constant 0 : i32
    %c0_i32_1 = arith.constant 0 : i32
    return %c0_i32, %c0_i32_0 : i32, i32
  }
  func.func @transform_8(%arg0: i32) -> (i32, i32) {
    %c0_i32 = arith.constant 0 : i32
    %c0_i32_0 = arith.constant 0 : i32
    %c0_i32_1 = arith.constant 0 : i32
    return %c0_i32, %c0_i32_0 : i32, i32
  }
  func.func @transform_9(%arg0: i32) -> (i32, i32) {
    %c0_i32 = arith.constant 0 : i32
    %c0_i32_0 = arith.constant 0 : i32
    %c0_i32_1 = arith.constant 0 : i32
    return %c0_i32, %c0_i32_0 : i32, i32
  }
  func.func @transform_10(%arg0: i32) -> (i32, i32) {
    %c0_i32 = arith.constant 0 : i32
    %c0_i32_0 = arith.constant 0 : i32
    %c0_i32_1 = arith.constant 0 : i32
    return %c0_i32, %c0_i32_0 : i32, i32
  }
  func.func @transform_11(%arg0: i32) -> (i32, i32) {
    %c0_i32 = arith.constant 0 : i32
    %c0_i32_0 = arith.constant 0 : i32
    return %c0_i32, %arg0 : i32, i32
  }
}

</mosaic_0001>

<llo_original>
// kernel: tpu_custom_call.1
$region0: #{tpu_custom_call.1}
  #allocation0 [shape = 'u32[]', space=smem, size = 0x4, offset = 0x4, fixed_abs, tag = 'smem constant byte address 0x4 - core index']
  #allocation1 [shape = 'u32[144,128]{1,0:T(1,128)}', space=vmem, size = 0x12000, scoped, tag = 'internal scratch']
  #allocation2 [shape = 'f32[1,1]{1,0:T(1,128)S(1)}', space=vmem, size = 0x200, scoped, tag = 'scoped memory for tpu_custom_call.1']
  %s0 = inlined_call_operand.vmem [shape: bf16[32,384], index: 0, kind: input, shape index: {}]
  %s1 = inlined_call_operand.vmem [shape: bf16[64,32], index: 1, kind: input, shape index: {}]
  %s2 = inlined_call_operand.vmem [shape: f32[64,1], index: 2, kind: input, shape index: {}]
  %s3 = inlined_call_operand.vmem [shape: bf16[64,64], index: 3, kind: input, shape index: {}]
  %s4 = inlined_call_operand.vmem [shape: f32[64,1], index: 4, kind: input, shape index: {}]
  %s5 = inlined_call_operand.vmem [shape: bf16[128,64], index: 5, kind: input, shape index: {}]
  %s6 = inlined_call_operand.vmem [shape: f32[128,1], index: 6, kind: input, shape index: {}]
  %s7 = inlined_call_operand.vmem [shape: bf16[128,128], index: 7, kind: input, shape index: {}]
  %s8 = inlined_call_operand.vmem [shape: f32[128,1], index: 8, kind: input, shape index: {}]
  %s9 = inlined_call_operand.vmem [shape: bf16[1,128], index: 9, kind: input, shape index: {}]
  %s10 = inlined_call_operand.<no memory space> [shape: f32[1,1], index: 10, kind: input, shape index: {}]
  %s11 = inlined_call_operand.hbm [shape: f32[1,384], index: 11, kind: output, shape index: {}]
  %s12 = sld [smem:[#allocation0]]
  $region118: #{tpu_custom_call.1} parent=0
    _
  %s14 = ssub.s32 1, %s12
  %s15 = scalar_select 0, %s14, %s12
  %v16 = vstv %s10
  %17 = vst [vmem:[#allocation2] sm:$0x1] %v16
  $region1: #{tpu_custom_call.1} parent=0
    #allocation3 [shape = 'u8[16384]{0}', space=vmem, size = 0x4000, scoped, tag = 'input window, operand 0']
    #allocation4 [shape = 'u8[1024]{0}', space=vmem, size = 0x400, scoped, tag = 'output window, operand 0']
    #allocation5 [shape = 's32[2]{0}', space=sflag, size = 0x8, scoped, tag = 'scoped memory for tpu_custom_call.1']
    %18 = vsyncpa [#allocation5], 0
    %s19 = scalar_lea.sflag [#allocation5], 1
    %20 = vsyncpa %s19, 0
    loop: start=0, step=1, limit=5
    $region2: #{tpu_custom_call.1} parent=1 // loop_pre_header
      _
    $region3: #{tpu_custom_call.1} parent=1 // loop_header
      %s22 = sphi 0, %s26
      %p23 = scmp.ge.s32.totalorder %s22, 5
      %s32 = sphi 0, %s34
      %s35 = sphi 0, %s32
      %s36 = sphi 0, %s35
      %s52 = sphi 0, %s36
      %s56 = sphi 0, %s56
      %s58 = sphi 0, %s56
      %s59 = sphi 0, %s58
      %s73 = sphi 0, %s59
      %s77 = sphi 0, %s77
      %s79 = sphi 0, %s77
      %s80 = sphi 0, %s79
      %s94 = sphi 0, %s80
      %s98 = sphi 0, %s98
      %s100 = sphi 0, %s98
      %s101 = sphi 0, %s100
      %s115 = sphi 0, %s101
      %s119 = sphi 0, %s119
      %s121 = sphi 0, %s119
      %s122 = sphi 0, %s121
      %s136 = sphi 0, %s122
      %s140 = sphi 0, %s140
      %s142 = sphi 0, %s140
      %s143 = sphi 0, %s142
      %s157 = sphi 0, %s143
      %s161 = sphi 0, %s161
      %s163 = sphi 0, %s161
      %s164 = sphi 0, %s163
      %s178 = sphi 0, %s164
      %s182 = sphi 0, %s182
      %s184 = sphi 0, %s182
      %s185 = sphi 0, %s184
      %s199 = sphi 0, %s185
      %s203 = sphi 0, %s203
      %s205 = sphi 0, %s203
      %s206 = sphi 0, %s205
      %s220 = sphi 0, %s206
      %s224 = sphi 0, %s224
      %s226 = sphi 0, %s224
      %s227 = sphi 0, %s226
      %s241 = sphi 0, %s227
      %s245 = sphi 0, %s245
      %s247 = sphi 0, %s245
      %s248 = sphi 0, %s247
      %s262 = sphi 0, %s248
      %s268 = sphi 0, %s270
      %s271 = sphi 0, %s268
      %s272 = sphi 0, %s271
      %s288 = sphi 0, %s272
    $region4: #{tpu_custom_call.1} parent=1 // loop_header_branch
      %25 = sbr.rel (%p23) target = $region8
    $region5: #{tpu_custom_call.1} parent=1 // loop_body
      %s27 = ssub.s32 %s22, 1
      %s28 = ssub.s32 %s22, 2
      %s29 = sadd.s32 %s22, 1
      %s30 = ssub.s32 %s22, %s29
      %p31 = scmp.eq.s32.totalorder %s30, 0
      %s33 = sadd.s32 %s32, 1
      %s34 = scalar_select %p31, %s32, %s33
      %p37 = pneg %p31
      %p38 = scmp.eq.s32.totalorder %s22, 2
      %p39 = por %p37, %p38
      %p40 = scmp.ne.s32.totalorder %s32, %s35
      %p41 = scmp.eq.s32.totalorder %s22, 0
      %p42 = por %p40, %p41
      %p43 = scmp.ne.s32.totalorder %s32, %s35
      %p44 = scmp.eq.s32.totalorder %s27, 2
      %p45 = por %p43, %p44
      %p46 = scmp.ne.s32.totalorder %s35, %s36
      %p47 = scmp.eq.s32.totalorder %s27, 0
      %p48 = por %p46, %p47
      %p49 = scmp.ne.s32.totalorder %s35, %s36
      %p50 = scmp.eq.s32.totalorder %s28, 2
      %p51 = por %p49, %p50
      %p53 = scmp.ne.s32.totalorder %s36, %s52
      %p54 = scmp.eq.s32.totalorder %s28, 0
      %p55 = por %p53, %p54
      %s57 = sadd.s32 %s56, 1
      %p60 = scmp.eq.s32.totalorder %s22, 2
      %p61 = scmp.ne.s32.totalorder %s56, %s58
      %p62 = scmp.eq.s32.totalorder %s22, 0
      %p63 = por %p61, %p62
      %p64 = scmp.ne.s32.totalorder %s56, %s58
      %p65 = scmp.eq.s32.totalorder %s27, 2
      %p66 = por %p64, %p65
      %p67 = scmp.ne.s32.totalorder %s58, %s59
      %p68 = scmp.eq.s32.totalorder %s27, 0
      %p69 = por %p67, %p68
      %p70 = scmp.ne.s32.totalorder %s58, %s59
      %p71 = scmp.eq.s32.totalorder %s28, 2
      %p72 = por %p70, %p71
      %p74 = scmp.ne.s32.totalorder %s59, %s73
      %p75 = scmp.eq.s32.totalorder %s28, 0
      %p76 = por %p74, %p75
      %s78 = sadd.s32 %s77, 1
      %p81 = scmp.eq.s32.totalorder %s22, 2
      %p82 = scmp.ne.s32.totalorder %s77, %s79
      %p83 = scmp.eq.s32.totalorder %s22, 0
      %p84 = por %p82, %p83
      %p85 = scmp.ne.s32.totalorder %s77, %s79
      %p86 = scmp.eq.s32.totalorder %s27, 2
      %p87 = por %p85, %p86
      %p88 = scmp.ne.s32.totalorder %s79, %s80
      %p89 = scmp.eq.s32.totalorder %s27, 0
      %p90 = por %p88, %p89
      %p91 = scmp.ne.s32.totalorder %s79, %s80
      %p92 = scmp.eq.s32.totalorder %s28, 2
      %p93 = por %p91, %p92
      %p95 = scmp.ne.s32.totalorder %s80, %s94
      %p96 = scmp.eq.s32.totalorder %s28, 0
      %p97 = por %p95, %p96
      %s99 = sadd.s32 %s98, 1
      %p102 = scmp.eq.s32.totalorder %s22, 2
      %p103 = scmp.ne.s32.totalorder %s98, %s100
      %p104 = scmp.eq.s32.totalorder %s22, 0
      %p105 = por %p103, %p104
      %p106 = scmp.ne.s32.totalorder %s98, %s100
      %p107 = scmp.eq.s32.totalorder %s27, 2
      %p108 = por %p106, %p107
      %p109 = scmp.ne.s32.totalorder %s100, %s101
      %p110 = scmp.eq.s32.totalorder %s27, 0
      %p111 = por %p109, %p110
      %p112 = scmp.ne.s32.totalorder %s100, %s101
      %p113 = scmp.eq.s32.totalorder %s28, 2
      %p114 = por %p112, %p113
      %p116 = scmp.ne.s32.totalorder %s101, %s115
      %p117 = scmp.eq.s32.totalorder %s28, 0
      %p118 = por %p116, %p117
      %s120 = sadd.s32 %s119, 1
      %p123 = scmp.eq.s32.totalorder %s22, 2
      %p124 = scmp.ne.s32.totalorder %s119, %s121
      %p125 = scmp.eq.s32.totalorder %s22, 0
      %p126 = por %p124, %p125
      %p127 = scmp.ne.s32.totalorder %s119, %s121
      %p128 = scmp.eq.s32.totalorder %s27, 2
      %p129 = por %p127, %p128
      %p130 = scmp.ne.s32.totalorder %s121, %s122
      %p131 = scmp.eq.s32.totalorder %s27, 0
      %p132 = por %p130, %p131
      %p133 = scmp.ne.s32.totalorder %s121, %s122
      %p134 = scmp.eq.s32.totalorder %s28, 2
      %p135 = por %p133, %p134
      %p137 = scmp.ne.s32.totalorder %s122, %s136
      %p138 = scmp.eq.s32.totalorder %s28, 0
      %p139 = por %p137, %p138
      %s141 = sadd.s32 %s140, 1
      %p144 = scmp.eq.s32.totalorder %s22, 2
      %p145 = scmp.ne.s32.totalorder %s140, %s142
      %p146 = scmp.eq.s32.totalorder %s22, 0
      %p147 = por %p145, %p146
      %p148 = scmp.ne.s32.totalorder %s140, %s142
      %p149 = scmp.eq.s32.totalorder %s27, 2
      %p150 = por %p148, %p149
      %p151 = scmp.ne.s32.totalorder %s142, %s143
      %p152 = scmp.eq.s32.totalorder %s27, 0
      %p153 = por %p151, %p152
      %p154 = scmp.ne.s32.totalorder %s142, %s143
      %p155 = scmp.eq.s32.totalorder %s28, 2
      %p156 = por %p154, %p155
      %p158 = scmp.ne.s32.totalorder %s143, %s157
      %p159 = scmp.eq.s32.totalorder %s28, 0
      %p160 = por %p158, %p159
      %s162 = sadd.s32 %s161, 1
      %p165 = scmp.eq.s32.totalorder %s22, 2
      %p166 = scmp.ne.s32.totalorder %s161, %s163
      %p167 = scmp.eq.s32.totalorder %s22, 0
      %p168 = por %p166, %p167
      %p169 = scmp.ne.s32.totalorder %s161, %s163
      %p170 = scmp.eq.s32.totalorder %s27, 2
      %p171 = por %p169, %p170
      %p172 = scmp.ne.s32.totalorder %s163, %s164
      %p173 = scmp.eq.s32.totalorder %s27, 0
      %p174 = por %p172, %p173
      %p175 = scmp.ne.s32.totalorder %s163, %s164
      %p176 = scmp.eq.s32.totalorder %s28, 2
      %p177 = por %p175, %p176
      %p179 = scmp.ne.s32.totalorder %s164, %s178
      %p180 = scmp.eq.s32.totalorder %s28, 0
      %p181 = por %p179, %p180
      %s183 = sadd.s32 %s182, 1
      %p186 = scmp.eq.s32.totalorder %s22, 2
      %p187 = scmp.ne.s32.totalorder %s182, %s184
      %p188 = scmp.eq.s32.totalorder %s22, 0
      %p189 = por %p187, %p188
      %p190 = scmp.ne.s32.totalorder %s182, %s184
      %p191 = scmp.eq.s32.totalorder %s27, 2
      %p192 = por %p190, %p191
      %p193 = scmp.ne.s32.totalorder %s184, %s185
      %p194 = scmp.eq.s32.totalorder %s27, 0
      %p195 = por %p193, %p194
      %p196 = scmp.ne.s32.totalorder %s184, %s185
      %p197 = scmp.eq.s32.totalorder %s28, 2
      %p198 = por %p196, %p197
      %p200 = scmp.ne.s32.totalorder %s185, %s199
      %p201 = scmp.eq.s32.totalorder %s28, 0
      %p202 = por %p200, %p201
      %s204 = sadd.s32 %s203, 1
      %p207 = scmp.eq.s32.totalorder %s22, 2
      %p208 = scmp.ne.s32.totalorder %s203, %s205
      %p209 = scmp.eq.s32.totalorder %s22, 0
      %p210 = por %p208, %p209
      %p211 = scmp.ne.s32.totalorder %s203, %s205
      %p212 = scmp.eq.s32.totalorder %s27, 2
      %p213 = por %p211, %p212
      %p214 = scmp.ne.s32.totalorder %s205, %s206
      %p215 = scmp.eq.s32.totalorder %s27, 0
      %p216 = por %p214, %p215
      %p217 = scmp.ne.s32.totalorder %s205, %s206
      %p218 = scmp.eq.s32.totalorder %s28, 2
      %p219 = por %p217, %p218
      %p221 = scmp.ne.s32.totalorder %s206, %s220
      %p222 = scmp.eq.s32.totalorder %s28, 0
      %p223 = por %p221, %p222
      %s225 = sadd.s32 %s224, 1
      %p228 = scmp.eq.s32.totalorder %s22, 2
      %p229 = scmp.ne.s32.totalorder %s224, %s226
      %p230 = scmp.eq.s32.totalorder %s22, 0
      %p231 = por %p229, %p230
      %p232 = scmp.ne.s32.totalorder %s224, %s226
      %p233 = scmp.eq.s32.totalorder %s27, 2
      %p234 = por %p232, %p233
      %p235 = scmp.ne.s32.totalorder %s226, %s227
      %p236 = scmp.eq.s32.totalorder %s27, 0
      %p237 = por %p235, %p236
      %p238 = scmp.ne.s32.totalorder %s226, %s227
      %p239 = scmp.eq.s32.totalorder %s28, 2
      %p240 = por %p238, %p239
      %p242 = scmp.ne.s32.totalorder %s227, %s241
      %p243 = scmp.eq.s32.totalorder %s28, 0
      %p244 = por %p242, %p243
      %s246 = sadd.s32 %s245, 1
      %p249 = scmp.eq.s32.totalorder %s22, 2
      %p250 = scmp.ne.s32.totalorder %s245, %s247
      %p251 = scmp.eq.s32.totalorder %s22, 0
      %p252 = por %p250, %p251
      %p253 = scmp.ne.s32.totalorder %s245, %s247
      %p254 = scmp.eq.s32.totalorder %s27, 2
      %p255 = por %p253, %p254
      %p256 = scmp.ne.s32.totalorder %s247, %s248
      %p257 = scmp.eq.s32.totalorder %s27, 0
      %p258 = por %p256, %p257
      %p259 = scmp.ne.s32.totalorder %s247, %s248
      %p260 = scmp.eq.s32.totalorder %s28, 2
      %p261 = por %p259, %p260
      %p263 = scmp.ne.s32.totalorder %s248, %s262
      %p264 = scmp.eq.s32.totalorder %s28, 0
      %p265 = por %p263, %p264
      %s266 = ssub.s32 %s22, %s29
      %p267 = scmp.eq.s32.totalorder %s266, 0
      %s269 = sadd.s32 %s268, 1
      %s270 = scalar_select %p267, %s268, %s269
      %p273 = pneg %p267
      %p274 = scmp.eq.s32.totalorder %s22, 2
      %p275 = por %p273, %p274
      %p276 = scmp.ne.s32.totalorder %s268, %s271
      %p277 = scmp.eq.s32.totalorder %s22, 0
      %p278 = por %p276, %p277
      %p279 = scmp.ne.s32.totalorder %s268, %s271
      %p280 = scmp.eq.s32.totalorder %s27, 2
      %p281 = por %p279, %p280
      %p282 = scmp.ne.s32.totalorder %s271, %s272
      %p283 = scmp.eq.s32.totalorder %s27, 0
      %p284 = por %p282, %p283
      %p285 = scmp.ne.s32.totalorder %s271, %s272
      %p286 = scmp.eq.s32.totalorder %s28, 2
      %p287 = por %p285, %p286
      %p289 = scmp.ne.s32.totalorder %s272, %s288
      %p290 = scmp.eq.s32.totalorder %s28, 0
      %p291 = por %p289, %p290
      %p292 = scmp.le.s32.totalorder 1, %s22
      %p293 = scmp.lt.s32.totalorder %s22, 4
      %p294 = pnand %p292, %p293
      %p295 = pneg %p294
      // Predicated region
      $region9: #{tpu_custom_call.1} parent=5 // pred_check
        _
      $region10: #{tpu_custom_call.1} parent=5 // pred_check_branch
        %297 = sbr.rel (%p294) target = $region12
      $region11: #{tpu_custom_call.1} parent=5 // pred_region
        %s298 = ssub.s32 %s22, 1
        // Predicated region
        $region13: #{tpu_custom_call.1} parent=11 // pred_check
          %p299 = pneg %p69
        $region14: #{tpu_custom_call.1} parent=11 // pred_check_branch
          %301 = sbr.rel (%p299) target = $region16
        $region15: #{tpu_custom_call.1} parent=11 // pred_region
          _
        $region16: #{tpu_custom_call.1} parent=11 // pred_fallthru
          _
        // Predicated region
        $region17: #{tpu_custom_call.1} parent=11 // pred_check
          %p302 = pneg %p90
        $region18: #{tpu_custom_call.1} parent=11 // pred_check_branch
          %304 = sbr.rel (%p302) target = $region20
        $region19: #{tpu_custom_call.1} parent=11 // pred_region
          _
        $region20: #{tpu_custom_call.1} parent=11 // pred_fallthru
          _
        // Predicated region
        $region21: #{tpu_custom_call.1} parent=11 // pred_check
          %p305 = pneg %p111
        $region22: #{tpu_custom_call.1} parent=11 // pred_check_branch
          %307 = sbr.rel (%p305) target = $region24
        $region23: #{tpu_custom_call.1} parent=11 // pred_region
          _
        $region24: #{tpu_custom_call.1} parent=11 // pred_fallthru
          _
        // Predicated region
        $region25: #{tpu_custom_call.1} parent=11 // pred_check
          %p308 = pneg %p132
        $region26: #{tpu_custom_call.1} parent=11 // pred_check_branch
          %310 = sbr.rel (%p308) target = $region28
        $region27: #{tpu_custom_call.1} parent=11 // pred_region
          _
        $region28: #{tpu_custom_call.1} parent=11 // pred_fallthru
          _
        // Predicated region
        $region29: #{tpu_custom_call.1} parent=11 // pred_check
          %p311 = pneg %p153
        $region30: #{tpu_custom_call.1} parent=11 // pred_check_branch
          %313 = sbr.rel (%p311) target = $region32
        $region31: #{tpu_custom_call.1} parent=11 // pred_region
          _
        $region32: #{tpu_custom_call.1} parent=11 // pred_fallthru
          _
        // Predicated region
        $region33: #{tpu_custom_call.1} parent=11 // pred_check
          %p314 = pneg %p174
        $region34: #{tpu_custom_call.1} parent=11 // pred_check_branch
          %316 = sbr.rel (%p314) target = $region36
        $region35: #{tpu_custom_call.1} parent=11 // pred_region
          _
        $region36: #{tpu_custom_call.1} parent=11 // pred_fallthru
          _
        // Predicated region
        $region37: #{tpu_custom_call.1} parent=11 // pred_check
          %p317 = pneg %p195
        $region38: #{tpu_custom_call.1} parent=11 // pred_check_branch
          %319 = sbr.rel (%p317) target = $region40
        $region39: #{tpu_custom_call.1} parent=11 // pred_region
          _
        $region40: #{tpu_custom_call.1} parent=11 // pred_fallthru
          _
        // Predicated region
        $region41: #{tpu_custom_call.1} parent=11 // pred_check
          %p320 = pneg %p216
        $region42: #{tpu_custom_call.1} parent=11 // pred_check_branch
          %322 = sbr.rel (%p320) target = $region44
        $region43: #{tpu_custom_call.1} parent=11 // pred_region
          _
        $region44: #{tpu_custom_call.1} parent=11 // pred_fallthru
          _
        // Predicated region
        $region45: #{tpu_custom_call.1} parent=11 // pred_check
          %p323 = pneg %p237
        $region46: #{tpu_custom_call.1} parent=11 // pred_check_branch
          %325 = sbr.rel (%p323) target = $region48
        $region47: #{tpu_custom_call.1} parent=11 // pred_region
          _
        $region48: #{tpu_custom_call.1} parent=11 // pred_fallthru
          _
        // Predicated region
        $region49: #{tpu_custom_call.1} parent=11 // pred_check
          %p326 = pneg %p258
        $region50: #{tpu_custom_call.1} parent=11 // pred_check_branch
          %328 = sbr.rel (%p326) target = $region52
        $region51: #{tpu_custom_call.1} parent=11 // pred_region
          _
        $region52: #{tpu_custom_call.1} parent=11 // pred_fallthru
          _
      $region12: #{tpu_custom_call.1} parent=5 // pred_fallthru
        _
      %p329 = scmp.lt.s32.totalorder %s22, 3
      // Predicated region
      $region53: #{tpu_custom_call.1} parent=5 // pred_check
        %p330 = pneg %p329
      $region54: #{tpu_custom_call.1} parent=5 // pred_check_branch
        %332 = sbr.rel (%p330) target = $region56
      $region55: #{tpu_custom_call.1} parent=5 // pred_region
        // Predicated region
        $region57: #{tpu_custom_call.1} parent=55 // pred_check
          %p333 = pneg %p42
        $region58: #{tpu_custom_call.1} parent=55 // pred_check_branch
          %335 = sbr.rel (%p333) target = $region60
        $region59: #{tpu_custom_call.1} parent=55 // pred_region
          %s336 = sand.u32 %s32, 1
          %s337 = sand.u32 %s32, 1
          %s338 = smul.addr %s337, 16
          %s339 = scalar_lea.vmem [#allocation3], %s338
          %s340 = smul.addr %s22, 4
          %s341 = scalar_lea.vmem %s0, %s340
          // Predicated region
          $region61: #{tpu_custom_call.1} parent=59 // pred_check
            _
          $region62: #{tpu_custom_call.1} parent=59 // pred_check_branch
            %343 = sbr.rel (0) target = $region64
          $region63: #{tpu_custom_call.1} parent=59 // pred_region
            // Predicated region
            $region65: #{tpu_custom_call.1} parent=63 // pred_check
              _
            $region66: #{tpu_custom_call.1} parent=63 // pred_check_branch
              %345 = sbr.rel target = $region68
            $region67: #{tpu_custom_call.1} parent=63 // pred_region
              // Predicated region
              $region80: #{tpu_custom_call.1} parent=67 // pred_check
                _
              $region81: #{tpu_custom_call.1} parent=67 // pred_check_branch
                %366 = sbr.rel (0) target = $region83
              $region82: #{tpu_custom_call.1} parent=67 // pred_region
                loop: start=0, step=1, limit=1
                $region84: #{tpu_custom_call.1} parent=82 // loop_pre_header
                  _
                $region85: #{tpu_custom_call.1} parent=82 // loop_header
                  %s368 = sphi 0, %s372
                  %p369 = scmp.ge.s32.totalorder %s368, 1
                  %s373 = sphi %s341, %s341
                  %s374 = sphi %s339, %s339
                $region86: #{tpu_custom_call.1} parent=82 // loop_header_branch
                  %371 = sbr.rel (%p369) target = $region90
                $region87: #{tpu_custom_call.1} parent=82 // loop_body
                  _
                $region88: #{tpu_custom_call.1} parent=82 // loop_footer
                  %s372 = sadd.s32 1, %s368
                $region89: #{tpu_custom_call.1} parent=82 // loop_footer_branch
                  %367 = sbr.rel target = $region85
                $region90: #{tpu_custom_call.1} parent=82 // loop_exit
                  _
                loop: start=0, step=1, limit=1
                $region91: #{tpu_custom_call.1} parent=82 // loop_pre_header
                  _
                $region92: #{tpu_custom_call.1} parent=82 // loop_header
                  %s377 = sphi 0, %s381
                  %p378 = scmp.ge.s32.totalorder %s377, 1
                  %s382 = sphi %s341, %s341
                  %s383 = sphi %s339, %s339
                $region93: #{tpu_custom_call.1} parent=82 // loop_header_branch
                  %380 = sbr.rel (%p378) target = $region97
                $region94: #{tpu_custom_call.1} parent=82 // loop_body
                  %v384 = vld [vmem:[%s382] sm:$0xf]
                  %385 = vst [vmem:[%s383] sm:$0xf] %v384
                  %v386 = vld [vmem:[%s382 + $0xc] sm:$0xf]
                  %387 = vst [vmem:[%s383 + $0x4] sm:$0xf] %v386
                  %v388 = vld [vmem:[%s382 + $0x18] sm:$0xf]
                  %389 = vst [vmem:[%s383 + $0x8] sm:$0xf] %v388
                  %v390 = vld [vmem:[%s382 + $0x24] sm:$0xf]
                  %391 = vst [vmem:[%s383 + $0xc] sm:$0xf] %v390
                $region95: #{tpu_custom_call.1} parent=82 // loop_footer
                  %s381 = sadd.s32 1, %s377
                $region96: #{tpu_custom_call.1} parent=82 // loop_footer_branch
                  %376 = sbr.rel target = $region92
                $region97: #{tpu_custom_call.1} parent=82 // loop_exit
                  _
              $region83: #{tpu_custom_call.1} parent=67 // pred_fallthru
                _
            $region68: #{tpu_custom_call.1} parent=63 // pred_fallthru
              _
            // Predicated region
            $region69: #{tpu_custom_call.1} parent=63 // pred_check
              _
            $region70: #{tpu_custom_call.1} parent=63 // pred_check_branch
              %347 = sbr.rel (0) target = $region72
            $region71: #{tpu_custom_call.1} parent=63 // pred_region
              loop: start=0, step=1, limit=1
              $region73: #{tpu_custom_call.1} parent=71 // loop_pre_header
                _
              $region74: #{tpu_custom_call.1} parent=71 // loop_header
                %s350 = sphi 0, %s354
                %p351 = scmp.ge.s32.totalorder %s350, 1
                %s355 = sphi %s341, %s341
                %s356 = sphi %s339, %s339
              $region75: #{tpu_custom_call.1} parent=71 // loop_header_branch
                %353 = sbr.rel (%p351) target = $region79
              $region76: #{tpu_custom_call.1} parent=71 // loop_body
                %v357 = vld [vmem:[%s355] sm:$0xf]
                %358 = vst [vmem:[%s356] sm:$0xf] %v357
                %v359 = vld [vmem:[%s355 + $0xc] sm:$0xf]
                %360 = vst [vmem:[%s356 + $0x4] sm:$0xf] %v359
                %v361 = vld [vmem:[%s355 + $0x18] sm:$0xf]
                %362 = vst [vmem:[%s356 + $0x8] sm:$0xf] %v361
                %v363 = vld [vmem:[%s355 + $0x24] sm:$0xf]
                %364 = vst [vmem:[%s356 + $0xc] sm:$0xf] %v363
              $region77: #{tpu_custom_call.1} parent=71 // loop_footer
                %s354 = sadd.s32 1, %s350
              $region78: #{tpu_custom_call.1} parent=71 // loop_footer_branch
                %349 = sbr.rel target = $region74
              $region79: #{tpu_custom_call.1} parent=71 // loop_exit
                _
            $region72: #{tpu_custom_call.1} parent=63 // pred_fallthru
              _
          $region64: #{tpu_custom_call.1} parent=59 // pred_fallthru
            _
          %392 = vnop
        $region60: #{tpu_custom_call.1} parent=55 // pred_fallthru
          _
      $region56: #{tpu_custom_call.1} parent=5 // pred_fallthru
        _
      %p393 = scmp.le.s32.totalorder 1, %s22
      %p394 = scmp.lt.s32.totalorder %s22, 4
      %p395 = pnand %p393, %p394
      %p396 = pneg %p395
      // Predicated region
      $region98: #{tpu_custom_call.1} parent=5 // pred_check
        _
      $region99: #{tpu_custom_call.1} parent=5 // pred_check_branch
        %398 = sbr.rel (%p395) target = $region101
      $region100: #{tpu_custom_call.1} parent=5 // pred_region
        %s399 = ssub.s32 %s22, 1
        %s400 = sand.u32 %s35, 1
        %s401 = sand.u32 %s35, 1
        %s402 = smul.addr %s401, 16
        %s403 = scalar_lea.vmem [#allocation3], %s402
        // Predicated region
        $region102: #{tpu_custom_call.1} parent=100 // pred_check
          %p404 = pneg %p48
        $region103: #{tpu_custom_call.1} parent=100 // pred_check_branch
          %406 = sbr.rel (%p404) target = $region105
        $region104: #{tpu_custom_call.1} parent=100 // pred_region
          _
        $region105: #{tpu_custom_call.1} parent=100 // pred_fallthru
          _
        %s407 = sand.u32 %s35, 1
        %s408 = sand.u32 %s35, 1
        %s409 = smul.addr %s408, 16
        %s410 = scalar_lea.vmem [#allocation3], %s409
        %p411 = pneg %p48
        %p412 = pneg %p45
        %p413 = pneg %p69
        %p414 = pneg %p66
        %p415 = pneg %p90
        %p416 = pneg %p87
        %p417 = pneg %p111
        %p418 = pneg %p108
        %p419 = pneg %p132
        %p420 = pneg %p129
        %p421 = pneg %p153
        %p422 = pneg %p150
        %p423 = pneg %p174
        %p424 = pneg %p171
        %p425 = pneg %p195
        %p426 = pneg %p192
        %p427 = pneg %p216
        %p428 = pneg %p213
        %p429 = pneg %p237
        %p430 = pneg %p234
        %p431 = pneg %p258
        %p432 = pneg %p255
        %p433 = pneg %p284
        %p434 = pneg %p281
        %s435 = sand.u32 %s271, 1
        %s436 = scalar_lea.sflag [#allocation5], %s435
        %s437 = sand.u32 %s271, 1
        %s438 = scalar_lea.vmem [#allocation4], %s437
        %v440 = vld [vmem:[%s403] sm:$0xf]
        %v441 = vld [vmem:[%s403 + $0x4] sm:$0xf]
        %v442 = vld [vmem:[%s403 + $0x8] sm:$0xf]
        %v443 = vld [vmem:[%s403 + $0xc] sm:$0xf]
        %v444 = vld [vmem:[%s1] sm:$0xf]
        %v445 = vld [vmem:[%s1 + $0x4] sm:$0xf]
        %v446 = vld [vmem:[%s1 + $0x8] sm:$0xf]
        %v447 = vld [vmem:[%s1 + $0xc] sm:$0xf]
        %v448 = vld [vmem:[%s1 + $0x10] sm:$0xf]
        %v449 = vld [vmem:[%s1 + $0x14] sm:$0xf]
        %v450 = vld [vmem:[%s1 + $0x18] sm:$0xf]
        %v451 = vld [vmem:[%s1 + $0x1c] sm:$0xf]
        %v452 = vld [vmem:[%s2] sm:$0xff]
        %v453 = vld [vmem:[%s2 + $0x8] sm:$0xff]
        %v454 = vld [vmem:[%s2 + $0x10] sm:$0xff]
        %v455 = vld [vmem:[%s2 + $0x18] sm:$0xff]
        %v456 = vld [vmem:[%s2 + $0x20] sm:$0xff]
        %v457 = vld [vmem:[%s2 + $0x28] sm:$0xff]
        %v458 = vld [vmem:[%s2 + $0x30] sm:$0xff]
        %v459 = vld [vmem:[%s2 + $0x38] sm:$0xff]
        %461 = vset.pattern.permute.xlu0 0
        %462 = vperm.xlu0 %461, %v452
        %v463 = vpop.permute.xlu0 %462
        %466 = vset.pattern.permute.xlu0 0
        %467 = vperm.xlu0 %466, %v453
        %v468 = vpop.permute.xlu0 %467
        %471 = vset.pattern.permute.xlu0 0
        %472 = vperm.xlu0 %471, %v454
        %v473 = vpop.permute.xlu0 %472
        %476 = vset.pattern.permute.xlu0 0
        %477 = vperm.xlu0 %476, %v455
        %v478 = vpop.permute.xlu0 %477
        %481 = vset.pattern.permute.xlu0 0
        %482 = vperm.xlu0 %481, %v456
        %v483 = vpop.permute.xlu0 %482
        %486 = vset.pattern.permute.xlu0 0
        %487 = vperm.xlu0 %486, %v457
        %v488 = vpop.permute.xlu0 %487
        %491 = vset.pattern.permute.xlu0 0
        %492 = vperm.xlu0 %491, %v458
        %v493 = vpop.permute.xlu0 %492
        %496 = vset.pattern.permute.xlu0 0
        %497 = vperm.xlu0 %496, %v459
        %v498 = vpop.permute.xlu0 %497
        %v508 = vunpack.c.l.b16 %v444
        %v509 = vunpack.c.l.b16 %v445
        %v510 = vunpack.c.l.b16 %v446
        %v511 = vunpack.c.l.b16 %v447
        %v512 = vunpack.c.l.b16 %v448
        %v513 = vunpack.c.l.b16 %v449
        %v514 = vunpack.c.l.b16 %v450
        %v515 = vunpack.c.l.b16 %v451
        %v516 = vpack.c.b16 %v509, %v508
        %v517 = vpack.c.b16 %v511, %v510
        %v518 = vpack.c.b16 %v513, %v512
        %v519 = vpack.c.b16 %v515, %v514
        %v524 = vunpack.c.l.b16 %v440
        %v525 = vunpack.c.l.b16 %v441
        %v526 = vunpack.c.l.b16 %v442
        %v527 = vunpack.c.l.b16 %v443
        %v528 = vpack.c.b16 %v525, %v524
        %v529 = vpack.c.b16 %v527, %v526
        %vm532 = vcmask 261120
        %v534 = vsel %vm532, %v516, 0
        %v537 = vsel %vm532, %v517, 0
        %v540 = vsel %vm532, %v518, 0
        %v543 = vsel %vm532, %v519, 0
        %545 = vmatprep.subr.bf16.mxu0 0
        %546 = vmatpush1.bf16.msra.mxu0 %v528
        %547 = vmatprep.subr.bf16.mxu0 0
        %548 = vmatpush1.bf16.msra.mxu0 %v529
        %549 = vmatprep.subr.bf16.mxu0 0
        %550 = vmatpush1.bf16.msra.mxu0 0
        %551 = vmatprep.subr.bf16.mxu0 0
        %552 = vmatpush1.bf16.msra.mxu0 0
        %553 = vmatprep.subr.bf16.mxu0 0
        %554 = vmatpush1.bf16.msra.mxu0 0
        %555 = vmatprep.subr.bf16.mxu0 0
        %556 = vmatpush1.bf16.msra.mxu0 0
        %557 = vmatprep.subr.bf16.mxu0 0
        %558 = vmatpush1.bf16.msra.mxu0 0
        %559 = vmatprep.subr.bf16.mxu0 0
        %560 = vmatpush1.bf16.msra.mxu0 0
        %561 = vmatprep.subr.bf16.mxu0 0
        %562 = vmatpush1.bf16.msra.mxu0 0
        %563 = vmatprep.subr.bf16.mxu0 0
        %564 = vmatpush1.bf16.msra.mxu0 0
        %565 = vmatprep.subr.bf16.mxu0 0
        %566 = vmatpush1.bf16.msra.mxu0 0
        %567 = vmatprep.subr.bf16.mxu0 0
        %568 = vmatpush1.bf16.msra.mxu0 0
        %569 = vmatprep.subr.bf16.mxu0 0
        %570 = vmatpush1.bf16.msra.mxu0 0
        %571 = vmatprep.subr.bf16.mxu0 0
        %572 = vmatpush1.bf16.msra.mxu0 0
        %573 = vmatprep.subr.bf16.mxu0 0
        %574 = vmatpush1.bf16.msra.mxu0 0
        %575 = vmatprep.subr.bf16.mxu0 0
        %576 = vmatpush1.bf16.msra.mxu0 0
        %577 = vmatprep.mubr.bf16.mxu0 0
        %578 = vmatmul.mubr.bf16.gmra.mrb[0].mxu0 %v534
        %v579 = vpop.f32.mrb[0].mxu0
        %v580 = vadd.f32 %v463, %v579
        %v581 = vpop.f32.mrb[0].mxu0
        %v582 = vpop.f32.mrb[0].mxu0
        %v583 = vadd.f32 %v468, %v582
        %v584 = vpop.f32.mrb[0].mxu0
        %585 = vmatprep.mubr.bf16.mxu0 0
        %586 = vmatmul.mubr.bf16.gmra.mrb[0].mxu0 %v537
        %v587 = vpop.f32.mrb[0].mxu0
        %v588 = vadd.f32 %v473, %v587
        %v589 = vpop.f32.mrb[0].mxu0
        %v590 = vpop.f32.mrb[0].mxu0
        %v591 = vadd.f32 %v478, %v590
        %v592 = vpop.f32.mrb[0].mxu0
        %593 = vmatprep.mubr.bf16.mxu0 0
        %594 = vmatmul.mubr.bf16.gmra.mrb[0].mxu0 %v540
        %v595 = vpop.f32.mrb[0].mxu0
        %v596 = vadd.f32 %v483, %v595
        %v597 = vpop.f32.mrb[0].mxu0
        %v598 = vpop.f32.mrb[0].mxu0
        %v599 = vadd.f32 %v488, %v598
        %v600 = vpop.f32.mrb[0].mxu0
        %601 = vmatprep.mubr.bf16.mxu0 0
        %602 = vmatmul.mubr.bf16.gmra.mrb[0].mxu0 %v543
        %v603 = vpop.f32.mrb[0].mxu0
        %v604 = vadd.f32 %v493, %v603
        %v605 = vpop.f32.mrb[0].mxu0
        %v606 = vpop.f32.mrb[0].mxu0
        %v607 = vadd.f32 %v498, %v606
        %v608 = vpop.f32.mrb[0].mxu0
        %609 = vdwg.mxu0
        %v610 = vmul.f32 %v580, 0.5
        %v611 = vmul.f32 %v583, 0.5
        %v612 = vmul.f32 %v588, 0.5
        %v613 = vmul.f32 %v591, 0.5
        %v614 = vmul.f32 %v596, 0.5
        %v615 = vmul.f32 %v599, 0.5
        %v616 = vmul.f32 %v604, 0.5
        %v617 = vmul.f32 %v607, 0.5
        %v618 = vtanh.pop %v610
        %v619 = vtanh.pop %v611
        %v620 = vtanh.pop %v612
        %v621 = vtanh.pop %v613
        %v622 = vtanh.pop %v614
        %v623 = vtanh.pop %v615
        %v624 = vtanh.pop %v616
        %v625 = vtanh.pop %v617
        %v626 = vadd.f32 %v618, 1.0
        %v627 = vadd.f32 %v619, 1.0
        %v628 = vadd.f32 %v620, 1.0
        %v629 = vadd.f32 %v621, 1.0
        %v630 = vadd.f32 %v622, 1.0
        %v631 = vadd.f32 %v623, 1.0
        %v632 = vadd.f32 %v624, 1.0
        %v633 = vadd.f32 %v625, 1.0
        %v634 = vmul.f32 %v626, 0.5
        %v635 = vmul.f32 %v627, 0.5
        %v636 = vmul.f32 %v628, 0.5
        %v637 = vmul.f32 %v629, 0.5
        %v638 = vmul.f32 %v630, 0.5
        %v639 = vmul.f32 %v631, 0.5
        %v640 = vmul.f32 %v632, 0.5
        %v641 = vmul.f32 %v633, 0.5
        %v642 = vpack.c.bf16 %v635, %v634
        %v643 = vpack.c.bf16 %v637, %v636
        %v644 = vpack.c.bf16 %v639, %v638
        %v645 = vpack.c.bf16 %v641, %v640
        %v646 = vld [vmem:[%s3] sm:$0xf]
        %v647 = vld [vmem:[%s3 + $0x4] sm:$0xf]
        %v648 = vld [vmem:[%s3 + $0x8] sm:$0xf]
        %v649 = vld [vmem:[%s3 + $0xc] sm:$0xf]
        %v650 = vld [vmem:[%s3 + $0x10] sm:$0xf]
        %v651 = vld [vmem:[%s3 + $0x14] sm:$0xf]
        %v652 = vld [vmem:[%s3 + $0x18] sm:$0xf]
        %v653 = vld [vmem:[%s3 + $0x1c] sm:$0xf]
        %v654 = vld [vmem:[%s4] sm:$0xff]
        %v655 = vld [vmem:[%s4 + $0x8] sm:$0xff]
        %v656 = vld [vmem:[%s4 + $0x10] sm:$0xff]
        %v657 = vld [vmem:[%s4 + $0x18] sm:$0xff]
        %v658 = vld [vmem:[%s4 + $0x20] sm:$0xff]
        %v659 = vld [vmem:[%s4 + $0x28] sm:$0xff]
        %v660 = vld [vmem:[%s4 + $0x30] sm:$0xff]
        %v661 = vld [vmem:[%s4 + $0x38] sm:$0xff]
        %663 = vset.pattern.permute.xlu0 0
        %664 = vperm.xlu0 %663, %v654
        %v665 = vpop.permute.xlu0 %664
        %668 = vset.pattern.permute.xlu0 0
        %669 = vperm.xlu0 %668, %v655
        %v670 = vpop.permute.xlu0 %669
        %673 = vset.pattern.permute.xlu0 0
        %674 = vperm.xlu0 %673, %v656
        %v675 = vpop.permute.xlu0 %674
        %678 = vset.pattern.permute.xlu0 0
        %679 = vperm.xlu0 %678, %v657
        %v680 = vpop.permute.xlu0 %679
        %683 = vset.pattern.permute.xlu0 0
        %684 = vperm.xlu0 %683, %v658
        %v685 = vpop.permute.xlu0 %684
        %688 = vset.pattern.permute.xlu0 0
        %689 = vperm.xlu0 %688, %v659
        %v690 = vpop.permute.xlu0 %689
        %693 = vset.pattern.permute.xlu0 0
        %694 = vperm.xlu0 %693, %v660
        %v695 = vpop.permute.xlu0 %694
        %698 = vset.pattern.permute.xlu0 0
        %699 = vperm.xlu0 %698, %v661
        %v700 = vpop.permute.xlu0 %699
        %v710 = vunpack.c.l.b16 %v646
        %v711 = vunpack.c.l.b16 %v647
        %v712 = vunpack.c.l.b16 %v648
        %v713 = vunpack.c.l.b16 %v649
        %v714 = vunpack.c.l.b16 %v650
        %v715 = vunpack.c.l.b16 %v651
        %v716 = vunpack.c.l.b16 %v652
        %v717 = vunpack.c.l.b16 %v653
        %v718 = vpack.c.b16 %v711, %v710
        %v719 = vpack.c.b16 %v713, %v712
        %v720 = vpack.c.b16 %v715, %v714
        %v721 = vpack.c.b16 %v717, %v716
        %vm722 = vcmask 523264
        %v724 = vsel %vm722, %v718, 0
        %v727 = vsel %vm722, %v719, 0
        %v730 = vsel %vm722, %v720, 0
        %v733 = vsel %vm722, %v721, 0
        %735 = vmatprep.subr.bf16.mxu0 0
        %736 = vmatpush1.bf16.msra.mxu0 %v642
        %737 = vmatprep.subr.bf16.mxu0 0
        %738 = vmatpush1.bf16.msra.mxu0 %v643
        %739 = vmatprep.subr.bf16.mxu0 0
        %740 = vmatpush1.bf16.msra.mxu0 %v644
        %741 = vmatprep.subr.bf16.mxu0 0
        %742 = vmatpush1.bf16.msra.mxu0 %v645
        %743 = vmatprep.subr.bf16.mxu0 0
        %744 = vmatpush1.bf16.msra.mxu0 0
        %745 = vmatprep.subr.bf16.mxu0 0
        %746 = vmatpush1.bf16.msra.mxu0 0
        %747 = vmatprep.subr.bf16.mxu0 0
        %748 = vmatpush1.bf16.msra.mxu0 0
        %749 = vmatprep.subr.bf16.mxu0 0
        %750 = vmatpush1.bf16.msra.mxu0 0
        %751 = vmatprep.subr.bf16.mxu0 0
        %752 = vmatpush1.bf16.msra.mxu0 0
        %753 = vmatprep.subr.bf16.mxu0 0
        %754 = vmatpush1.bf16.msra.mxu0 0
        %755 = vmatprep.subr.bf16.mxu0 0
        %756 = vmatpush1.bf16.msra.mxu0 0
        %757 = vmatprep.subr.bf16.mxu0 0
        %758 = vmatpush1.bf16.msra.mxu0 0
        %759 = vmatprep.subr.bf16.mxu0 0
        %760 = vmatpush1.bf16.msra.mxu0 0
        %761 = vmatprep.subr.bf16.mxu0 0
        %762 = vmatpush1.bf16.msra.mxu0 0
        %763 = vmatprep.subr.bf16.mxu0 0
        %764 = vmatpush1.bf16.msra.mxu0 0
        %765 = vmatprep.subr.bf16.mxu0 0
        %766 = vmatpush1.bf16.msra.mxu0 0
        %767 = vmatprep.mubr.bf16.mxu0 0
        %768 = vmatmul.mubr.bf16.gmra.mrb[0].mxu0 %v724
        %v769 = vpop.f32.mrb[0].mxu0
        %v770 = vadd.f32 %v665, %v769
        %v771 = vpop.f32.mrb[0].mxu0
        %v772 = vpop.f32.mrb[0].mxu0
        %v773 = vadd.f32 %v670, %v772
        %v774 = vpop.f32.mrb[0].mxu0
        %775 = vmatprep.mubr.bf16.mxu0 0
        %776 = vmatmul.mubr.bf16.gmra.mrb[0].mxu0 %v727
        %v777 = vpop.f32.mrb[0].mxu0
        %v778 = vadd.f32 %v675, %v777
        %v779 = vpop.f32.mrb[0].mxu0
        %v780 = vpop.f32.mrb[0].mxu0
        %v781 = vadd.f32 %v680, %v780
        %v782 = vpop.f32.mrb[0].mxu0
        %783 = vmatprep.mubr.bf16.mxu0 0
        %784 = vmatmul.mubr.bf16.gmra.mrb[0].mxu0 %v730
        %v785 = vpop.f32.mrb[0].mxu0
        %v786 = vadd.f32 %v685, %v785
        %v787 = vpop.f32.mrb[0].mxu0
        %v788 = vpop.f32.mrb[0].mxu0
        %v789 = vadd.f32 %v690, %v788
        %v790 = vpop.f32.mrb[0].mxu0
        %791 = vmatprep.mubr.bf16.mxu0 0
        %792 = vmatmul.mubr.bf16.gmra.mrb[0].mxu0 %v733
        %v793 = vpop.f32.mrb[0].mxu0
        %v794 = vadd.f32 %v695, %v793
        %v795 = vpop.f32.mrb[0].mxu0
        %v796 = vpop.f32.mrb[0].mxu0
        %v797 = vadd.f32 %v700, %v796
        %v798 = vpop.f32.mrb[0].mxu0
        %799 = vdwg.mxu0
        %v800 = vmul.f32 %v770, 0.5
        %v801 = vmul.f32 %v773, 0.5
        %v802 = vmul.f32 %v778, 0.5
        %v803 = vmul.f32 %v781, 0.5
        %v804 = vmul.f32 %v786, 0.5
        %v805 = vmul.f32 %v789, 0.5
        %v806 = vmul.f32 %v794, 0.5
        %v807 = vmul.f32 %v797, 0.5
        %v808 = vtanh.pop %v800
        %v809 = vtanh.pop %v801
        %v810 = vtanh.pop %v802
        %v811 = vtanh.pop %v803
        %v812 = vtanh.pop %v804
        %v813 = vtanh.pop %v805
        %v814 = vtanh.pop %v806
        %v815 = vtanh.pop %v807
        %v816 = vadd.f32 %v808, 1.0
        %v817 = vadd.f32 %v809, 1.0
        %v818 = vadd.f32 %v810, 1.0
        %v819 = vadd.f32 %v811, 1.0
        %v820 = vadd.f32 %v812, 1.0
        %v821 = vadd.f32 %v813, 1.0
        %v822 = vadd.f32 %v814, 1.0
        %v823 = vadd.f32 %v815, 1.0
        %v824 = vmul.f32 %v816, 0.5
        %v825 = vmul.f32 %v817, 0.5
        %v826 = vmul.f32 %v818, 0.5
        %v827 = vmul.f32 %v819, 0.5
        %v828 = vmul.f32 %v820, 0.5
        %v829 = vmul.f32 %v821, 0.5
        %v830 = vmul.f32 %v822, 0.5
        %v831 = vmul.f32 %v823, 0.5
        %v832 = vpack.c.bf16 %v825, %v824
        %v833 = vpack.c.bf16 %v827, %v826
        %v834 = vpack.c.bf16 %v829, %v828
        %v835 = vpack.c.bf16 %v831, %v830
        %v836 = vld [vmem:[%s5] sm:$0xf]
        %v837 = vld [vmem:[%s5 + $0x4] sm:$0xf]
        %v838 = vld [vmem:[%s5 + $0x8] sm:$0xf]
        %v839 = vld [vmem:[%s5 + $0xc] sm:$0xf]
        %v840 = vld [vmem:[%s5 + $0x10] sm:$0xf]
        %v841 = vld [vmem:[%s5 + $0x14] sm:$0xf]
        %v842 = vld [vmem:[%s5 + $0x18] sm:$0xf]
        %v843 = vld [vmem:[%s5 + $0x1c] sm:$0xf]
        %v844 = vld [vmem:[%s5 + $0x20] sm:$0xf]
        %v845 = vld [vmem:[%s5 + $0x24] sm:$0xf]
        %v846 = vld [vmem:[%s5 + $0x28] sm:$0xf]
        %v847 = vld [vmem:[%s5 + $0x2c] sm:$0xf]
        %v848 = vld [vmem:[%s5 + $0x30] sm:$0xf]
        %v849 = vld [vmem:[%s5 + $0x34] sm:$0xf]
        %v850 = vld [vmem:[%s5 + $0x38] sm:$0xf]
        %v851 = vld [vmem:[%s5 + $0x3c] sm:$0xf]
        %v852 = vld [vmem:[%s6] sm:$0xff]
        %v853 = vld [vmem:[%s6 + $0x8] sm:$0xff]
        %v854 = vld [vmem:[%s6 + $0x10] sm:$0xff]
        %v855 = vld [vmem:[%s6 + $0x18] sm:$0xff]
        %v856 = vld [vmem:[%s6 + $0x20] sm:$0xff]
        %v857 = vld [vmem:[%s6 + $0x28] sm:$0xff]
        %v858 = vld [vmem:[%s6 + $0x30] sm:$0xff]
        %v859 = vld [vmem:[%s6 + $0x38] sm:$0xff]
        %v860 = vld [vmem:[%s6 + $0x40] sm:$0xff]
        %v861 = vld [vmem:[%s6 + $0x48] sm:$0xff]
        %v862 = vld [vmem:[%s6 + $0x50] sm:$0xff]
        %v863 = vld [vmem:[%s6 + $0x58] sm:$0xff]
        %v864 = vld [vmem:[%s6 + $0x60] sm:$0xff]
        %v865 = vld [vmem:[%s6 + $0x68] sm:$0xff]
        %v866 = vld [vmem:[%s6 + $0x70] sm:$0xff]
        %v867 = vld [vmem:[%s6 + $0x78] sm:$0xff]
        %869 = vset.pattern.permute.xlu0 0
        %870 = vperm.xlu0 %869, %v852
        %v871 = vpop.permute.xlu0 %870
        %874 = vset.pattern.permute.xlu0 0
        %875 = vperm.xlu0 %874, %v853
        %v876 = vpop.permute.xlu0 %875
        %879 = vset.pattern.permute.xlu0 0
        %880 = vperm.xlu0 %879, %v854
        %v881 = vpop.permute.xlu0 %880
        %884 = vset.pattern.permute.xlu0 0
        %885 = vperm.xlu0 %884, %v855
        %v886 = vpop.permute.xlu0 %885
        %889 = vset.pattern.permute.xlu0 0
        %890 = vperm.xlu0 %889, %v856
        %v891 = vpop.permute.xlu0 %890
        %894 = vset.pattern.permute.xlu0 0
        %895 = vperm.xlu0 %894, %v857
        %v896 = vpop.permute.xlu0 %895
        %899 = vset.pattern.permute.xlu0 0
        %900 = vperm.xlu0 %899, %v858
        %v901 = vpop.permute.xlu0 %900
        %904 = vset.pattern.permute.xlu0 0
        %905 = vperm.xlu0 %904, %v859
        %v906 = vpop.permute.xlu0 %905
        %909 = vset.pattern.permute.xlu0 0
        %910 = vperm.xlu0 %909, %v860
        %v911 = vpop.permute.xlu0 %910
        %914 = vset.pattern.permute.xlu0 0
        %915 = vperm.xlu0 %914, %v861
        %v916 = vpop.permute.xlu0 %915
        %919 = vset.pattern.permute.xlu0 0
        %920 = vperm.xlu0 %919, %v862
        %v921 = vpop.permute.xlu0 %920
        %924 = vset.pattern.permute.xlu0 0
        %925 = vperm.xlu0 %924, %v863
        %v926 = vpop.permute.xlu0 %925
        %929 = vset.pattern.permute.xlu0 0
        %930 = vperm.xlu0 %929, %v864
        %v931 = vpop.permute.xlu0 %930
        %934 = vset.pattern.permute.xlu0 0
        %935 = vperm.xlu0 %934, %v865
        %v936 = vpop.permute.xlu0 %935
        %939 = vset.pattern.permute.xlu0 0
        %940 = vperm.xlu0 %939, %v866
        %v941 = vpop.permute.xlu0 %940
        %944 = vset.pattern.permute.xlu0 0
        %945 = vperm.xlu0 %944, %v867
        %v946 = vpop.permute.xlu0 %945
        %v964 = vunpack.c.l.b16 %v836
        %v965 = vunpack.c.l.b16 %v837
        %v966 = vunpack.c.l.b16 %v838
        %v967 = vunpack.c.l.b16 %v839
        %v968 = vunpack.c.l.b16 %v840
        %v969 = vunpack.c.l.b16 %v841
        %v970 = vunpack.c.l.b16 %v842
        %v971 = vunpack.c.l.b16 %v843
        %v972 = vunpack.c.l.b16 %v844
        %v973 = vunpack.c.l.b16 %v845
        %v974 = vunpack.c.l.b16 %v846
        %v975 = vunpack.c.l.b16 %v847
        %v976 = vunpack.c.l.b16 %v848
        %v977 = vunpack.c.l.b16 %v849
        %v978 = vunpack.c.l.b16 %v850
        %v979 = vunpack.c.l.b16 %v851
        %v980 = vpack.c.b16 %v965, %v964
        %v981 = vpack.c.b16 %v967, %v966
        %v982 = vpack.c.b16 %v969, %v968
        %v983 = vpack.c.b16 %v971, %v970
        %v984 = vpack.c.b16 %v973, %v972
        %v985 = vpack.c.b16 %v975, %v974
        %v986 = vpack.c.b16 %v977, %v976
        %v987 = vpack.c.b16 %v979, %v978
        %v989 = vsel %vm722, %v980, 0
        %v992 = vsel %vm722, %v981, 0
        %v995 = vsel %vm722, %v982, 0
        %v998 = vsel %vm722, %v983, 0
        %v1001 = vsel %vm722, %v984, 0
        %v1004 = vsel %vm722, %v985, 0
        %v1007 = vsel %vm722, %v986, 0
        %v1010 = vsel %vm722, %v987, 0
        %1012 = vmatprep.subr.bf16.mxu0 0
        %1013 = vmatpush1.bf16.msra.mxu0 %v832
        %1014 = vmatprep.subr.bf16.mxu0 0
        %1015 = vmatpush1.bf16.msra.mxu0 %v833
        %1016 = vmatprep.subr.bf16.mxu0 0
        %1017 = vmatpush1.bf16.msra.mxu0 %v834
        %1018 = vmatprep.subr.bf16.mxu0 0
        %1019 = vmatpush1.bf16.msra.mxu0 %v835
        %1020 = vmatprep.subr.bf16.mxu0 0
        %1021 = vmatpush1.bf16.msra.mxu0 0
        %1022 = vmatprep.subr.bf16.mxu0 0
        %1023 = vmatpush1.bf16.msra.mxu0 0
        %1024 = vmatprep.subr.bf16.mxu0 0
        %1025 = vmatpush1.bf16.msra.mxu0 0
        %1026 = vmatprep.subr.bf16.mxu0 0
        %1027 = vmatpush1.bf16.msra.mxu0 0
        %1028 = vmatprep.subr.bf16.mxu0 0
        %1029 = vmatpush1.bf16.msra.mxu0 0
        %1030 = vmatprep.subr.bf16.mxu0 0
        %1031 = vmatpush1.bf16.msra.mxu0 0
        %1032 = vmatprep.subr.bf16.mxu0 0
        %1033 = vmatpush1.bf16.msra.mxu0 0
        %1034 = vmatprep.subr.bf16.mxu0 0
        %1035 = vmatpush1.bf16.msra.mxu0 0
        %1036 = vmatprep.subr.bf16.mxu0 0
        %1037 = vmatpush1.bf16.msra.mxu0 0
        %1038 = vmatprep.subr.bf16.mxu0 0
        %1039 = vmatpush1.bf16.msra.mxu0 0
        %1040 = vmatprep.subr.bf16.mxu0 0
        %1041 = vmatpush1.bf16.msra.mxu0 0
        %1042 = vmatprep.subr.bf16.mxu0 0
        %1043 = vmatpush1.bf16.msra.mxu0 0
        %1044 = vmatprep.mubr.bf16.mxu0 0
        %1045 = vmatmul.mubr.bf16.gmra.mrb[0].mxu0 %v989
        %v1046 = vpop.f32.mrb[0].mxu0
        %v1047 = vadd.f32 %v871, %v1046
        %v1048 = vpop.f32.mrb[0].mxu0
        %v1049 = vpop.f32.mrb[0].mxu0
        %v1050 = vadd.f32 %v876, %v1049
        %v1051 = vpop.f32.mrb[0].mxu0
        %1052 = vmatprep.mubr.bf16.mxu0 0
        %1053 = vmatmul.mubr.bf16.gmra.mrb[0].mxu0 %v992
        %v1054 = vpop.f32.mrb[0].mxu0
        %v1055 = vadd.f32 %v881, %v1054
        %v1056 = vpop.f32.mrb[0].mxu0
        %v1057 = vpop.f32.mrb[0].mxu0
        %v1058 = vadd.f32 %v886, %v1057
        %v1059 = vpop.f32.mrb[0].mxu0
        %1060 = vmatprep.mubr.bf16.mxu0 0
        %1061 = vmatmul.mubr.bf16.gmra.mrb[0].mxu0 %v995
        %v1062 = vpop.f32.mrb[0].mxu0
        %v1063 = vadd.f32 %v891, %v1062
        %v1064 = vpop.f32.mrb[0].mxu0
        %v1065 = vpop.f32.mrb[0].mxu0
        %v1066 = vadd.f32 %v896, %v1065
        %v1067 = vpop.f32.mrb[0].mxu0
        %1068 = vmatprep.mubr.bf16.mxu0 0
        %1069 = vmatmul.mubr.bf16.gmra.mrb[0].mxu0 %v998
        %v1070 = vpop.f32.mrb[0].mxu0
        %v1071 = vadd.f32 %v901, %v1070
        %v1072 = vpop.f32.mrb[0].mxu0
        %v1073 = vpop.f32.mrb[0].mxu0
        %v1074 = vadd.f32 %v906, %v1073
        %v1075 = vpop.f32.mrb[0].mxu0
        %1076 = vmatprep.mubr.bf16.mxu0 0
        %1077 = vmatmul.mubr.bf16.gmra.mrb[0].mxu0 %v1001
        %v1078 = vpop.f32.mrb[0].mxu0
        %v1079 = vadd.f32 %v911, %v1078
        %v1080 = vpop.f32.mrb[0].mxu0
        %v1081 = vpop.f32.mrb[0].mxu0
        %v1082 = vadd.f32 %v916, %v1081
        %v1083 = vpop.f32.mrb[0].mxu0
        %1084 = vmatprep.mubr.bf16.mxu0 0
        %1085 = vmatmul.mubr.bf16.gmra.mrb[0].mxu0 %v1004
        %v1086 = vpop.f32.mrb[0].mxu0
        %v1087 = vadd.f32 %v921, %v1086
        %v1088 = vpop.f32.mrb[0].mxu0
        %v1089 = vpop.f32.mrb[0].mxu0
        %v1090 = vadd.f32 %v926, %v1089
        %v1091 = vpop.f32.mrb[0].mxu0
        %1092 = vmatprep.mubr.bf16.mxu0 0
        %1093 = vmatmul.mubr.bf16.gmra.mrb[0].mxu0 %v1007
        %v1094 = vpop.f32.mrb[0].mxu0
        %v1095 = vadd.f32 %v931, %v1094
        %v1096 = vpop.f32.mrb[0].mxu0
        %v1097 = vpop.f32.mrb[0].mxu0
        %v1098 = vadd.f32 %v936, %v1097
        %v1099 = vpop.f32.mrb[0].mxu0
        %1100 = vmatprep.mubr.bf16.mxu0 0
        %1101 = vmatmul.mubr.bf16.gmra.mrb[0].mxu0 %v1010
        %v1102 = vpop.f32.mrb[0].mxu0
        %v1103 = vadd.f32 %v941, %v1102
        %v1104 = vpop.f32.mrb[0].mxu0
        %v1105 = vpop.f32.mrb[0].mxu0
        %v1106 = vadd.f32 %v946, %v1105
        %v1107 = vpop.f32.mrb[0].mxu0
        %1108 = vdwg.mxu0
        %v1109 = vmul.f32 %v1047, 0.5
        %v1110 = vmul.f32 %v1050, 0.5
        %v1111 = vmul.f32 %v1055, 0.5
        %v1112 = vmul.f32 %v1058, 0.5
        %v1113 = vmul.f32 %v1063, 0.5
        %v1114 = vmul.f32 %v1066, 0.5
        %v1115 = vmul.f32 %v1071, 0.5
        %v1116 = vmul.f32 %v1074, 0.5
        %v1117 = vmul.f32 %v1079, 0.5
        %v1118 = vmul.f32 %v1082, 0.5
        %v1119 = vmul.f32 %v1087, 0.5
        %v1120 = vmul.f32 %v1090, 0.5
        %v1121 = vmul.f32 %v1095, 0.5
        %v1122 = vmul.f32 %v1098, 0.5
        %v1123 = vmul.f32 %v1103, 0.5
        %v1124 = vmul.f32 %v1106, 0.5
        %v1125 = vtanh.pop %v1109
        %v1126 = vtanh.pop %v1110
        %v1127 = vtanh.pop %v1111
        %v1128 = vtanh.pop %v1112
        %v1129 = vtanh.pop %v1113
        %v1130 = vtanh.pop %v1114
        %v1131 = vtanh.pop %v1115
        %v1132 = vtanh.pop %v1116
        %v1133 = vtanh.pop %v1117
        %v1134 = vtanh.pop %v1118
        %v1135 = vtanh.pop %v1119
        %v1136 = vtanh.pop %v1120
        %v1137 = vtanh.pop %v1121
        %v1138 = vtanh.pop %v1122
        %v1139 = vtanh.pop %v1123
        %v1140 = vtanh.pop %v1124
        %v1141 = vadd.f32 %v1125, 1.0
        %v1142 = vadd.f32 %v1126, 1.0
        %v1143 = vadd.f32 %v1127, 1.0
        %v1144 = vadd.f32 %v1128, 1.0
        %v1145 = vadd.f32 %v1129, 1.0
        %v1146 = vadd.f32 %v1130, 1.0
        %v1147 = vadd.f32 %v1131, 1.0
        %v1148 = vadd.f32 %v1132, 1.0
        %v1149 = vadd.f32 %v1133, 1.0
        %v1150 = vadd.f32 %v1134, 1.0
        %v1151 = vadd.f32 %v1135, 1.0
        %v1152 = vadd.f32 %v1136, 1.0
        %v1153 = vadd.f32 %v1137, 1.0
        %v1154 = vadd.f32 %v1138, 1.0
        %v1155 = vadd.f32 %v1139, 1.0
        %v1156 = vadd.f32 %v1140, 1.0
        %v1157 = vmul.f32 %v1141, 0.5
        %v1158 = vmul.f32 %v1142, 0.5
        %v1159 = vmul.f32 %v1143, 0.5
        %v1160 = vmul.f32 %v1144, 0.5
        %v1161 = vmul.f32 %v1145, 0.5
        %v1162 = vmul.f32 %v1146, 0.5
        %v1163 = vmul.f32 %v1147, 0.5
        %v1164 = vmul.f32 %v1148, 0.5
        %v1165 = vmul.f32 %v1149, 0.5
        %v1166 = vmul.f32 %v1150, 0.5
        %v1167 = vmul.f32 %v1151, 0.5
        %v1168 = vmul.f32 %v1152, 0.5
        %v1169 = vmul.f32 %v1153, 0.5
        %v1170 = vmul.f32 %v1154, 0.5
        %v1171 = vmul.f32 %v1155, 0.5
        %v1172 = vmul.f32 %v1156, 0.5
        %v1173 = vpack.c.bf16 %v1158, %v1157
        %v1174 = vpack.c.bf16 %v1160, %v1159
        %v1175 = vpack.c.bf16 %v1162, %v1161
        %v1176 = vpack.c.bf16 %v1164, %v1163
        %v1177 = vpack.c.bf16 %v1166, %v1165
        %v1178 = vpack.c.bf16 %v1168, %v1167
        %v1179 = vpack.c.bf16 %v1170, %v1169
        %v1180 = vpack.c.bf16 %v1172, %v1171
        %v1181 = vld [vmem:[%s7] sm:$0xf]
        %v1182 = vld [vmem:[%s7 + $0x4] sm:$0xf]
        %v1183 = vld [vmem:[%s7 + $0x8] sm:$0xf]
        %v1184 = vld [vmem:[%s7 + $0xc] sm:$0xf]
        %v1185 = vld [vmem:[%s7 + $0x10] sm:$0xf]
        %v1186 = vld [vmem:[%s7 + $0x14] sm:$0xf]
        %v1187 = vld [vmem:[%s7 + $0x18] sm:$0xf]
        %v1188 = vld [vmem:[%s7 + $0x1c] sm:$0xf]
        %v1189 = vld [vmem:[%s7 + $0x20] sm:$0xf]
        %v1190 = vld [vmem:[%s7 + $0x24] sm:$0xf]
        %v1191 = vld [vmem:[%s7 + $0x28] sm:$0xf]
        %v1192 = vld [vmem:[%s7 + $0x2c] sm:$0xf]
        %v1193 = vld [vmem:[%s7 + $0x30] sm:$0xf]
        %v1194 = vld [vmem:[%s7 + $0x34] sm:$0xf]
        %v1195 = vld [vmem:[%s7 + $0x38] sm:$0xf]
        %v1196 = vld [vmem:[%s7 + $0x3c] sm:$0xf]
        %v1197 = vld [vmem:[%s8] sm:$0xff]
        %v1198 = vld [vmem:[%s8 + $0x8] sm:$0xff]
        %v1199 = vld [vmem:[%s8 + $0x10] sm:$0xff]
        %v1200 = vld [vmem:[%s8 + $0x18] sm:$0xff]
        %v1201 = vld [vmem:[%s8 + $0x20] sm:$0xff]
        %v1202 = vld [vmem:[%s8 + $0x28] sm:$0xff]
        %v1203 = vld [vmem:[%s8 + $0x30] sm:$0xff]
        %v1204 = vld [vmem:[%s8 + $0x38] sm:$0xff]
        %v1205 = vld [vmem:[%s8 + $0x40] sm:$0xff]
        %v1206 = vld [vmem:[%s8 + $0x48] sm:$0xff]
        %v1207 = vld [vmem:[%s8 + $0x50] sm:$0xff]
        %v1208 = vld [vmem:[%s8 + $0x58] sm:$0xff]
        %v1209 = vld [vmem:[%s8 + $0x60] sm:$0xff]
        %v1210 = vld [vmem:[%s8 + $0x68] sm:$0xff]
        %v1211 = vld [vmem:[%s8 + $0x70] sm:$0xff]
        %v1212 = vld [vmem:[%s8 + $0x78] sm:$0xff]
        %1214 = vset.pattern.permute.xlu0 0
        %1215 = vperm.xlu0 %1214, %v1197
        %v1216 = vpop.permute.xlu0 %1215
        %1219 = vset.pattern.permute.xlu0 0
        %1220 = vperm.xlu0 %1219, %v1198
        %v1221 = vpop.permute.xlu0 %1220
        %1224 = vset.pattern.permute.xlu0 0
        %1225 = vperm.xlu0 %1224, %v1199
        %v1226 = vpop.permute.xlu0 %1225
        %1229 = vset.pattern.permute.xlu0 0
        %1230 = vperm.xlu0 %1229, %v1200
        %v1231 = vpop.permute.xlu0 %1230
        %1234 = vset.pattern.permute.xlu0 0
        %1235 = vperm.xlu0 %1234, %v1201
        %v1236 = vpop.permute.xlu0 %1235
        %1239 = vset.pattern.permute.xlu0 0
        %1240 = vperm.xlu0 %1239, %v1202
        %v1241 = vpop.permute.xlu0 %1240
        %1244 = vset.pattern.permute.xlu0 0
        %1245 = vperm.xlu0 %1244, %v1203
        %v1246 = vpop.permute.xlu0 %1245
        %1249 = vset.pattern.permute.xlu0 0
        %1250 = vperm.xlu0 %1249, %v1204
        %v1251 = vpop.permute.xlu0 %1250
        %1254 = vset.pattern.permute.xlu0 0
        %1255 = vperm.xlu0 %1254, %v1205
        %v1256 = vpop.permute.xlu0 %1255
        %1259 = vset.pattern.permute.xlu0 0
        %1260 = vperm.xlu0 %1259, %v1206
        %v1261 = vpop.permute.xlu0 %1260
        %1264 = vset.pattern.permute.xlu0 0
        %1265 = vperm.xlu0 %1264, %v1207
        %v1266 = vpop.permute.xlu0 %1265
        %1269 = vset.pattern.permute.xlu0 0
        %1270 = vperm.xlu0 %1269, %v1208
        %v1271 = vpop.permute.xlu0 %1270
        %1274 = vset.pattern.permute.xlu0 0
        %1275 = vperm.xlu0 %1274, %v1209
        %v1276 = vpop.permute.xlu0 %1275
        %1279 = vset.pattern.permute.xlu0 0
        %1280 = vperm.xlu0 %1279, %v1210
        %v1281 = vpop.permute.xlu0 %1280
        %1284 = vset.pattern.permute.xlu0 0
        %1285 = vperm.xlu0 %1284, %v1211
        %v1286 = vpop.permute.xlu0 %1285
        %1289 = vset.pattern.permute.xlu0 0
        %1290 = vperm.xlu0 %1289, %v1212
        %v1291 = vpop.permute.xlu0 %1290
        %v1309 = vunpack.c.l.b16 %v1181
        %v1310 = vunpack.c.l.b16 %v1182
        %v1311 = vunpack.c.l.b16 %v1183
        %v1312 = vunpack.c.l.b16 %v1184
        %v1313 = vunpack.c.l.b16 %v1185
        %v1314 = vunpack.c.l.b16 %v1186
        %v1315 = vunpack.c.l.b16 %v1187
        %v1316 = vunpack.c.l.b16 %v1188
        %v1317 = vunpack.c.l.b16 %v1189
        %v1318 = vunpack.c.l.b16 %v1190
        %v1319 = vunpack.c.l.b16 %v1191
        %v1320 = vunpack.c.l.b16 %v1192
        %v1321 = vunpack.c.l.b16 %v1193
        %v1322 = vunpack.c.l.b16 %v1194
        %v1323 = vunpack.c.l.b16 %v1195
        %v1324 = vunpack.c.l.b16 %v1196
        %v1325 = vpack.c.b16 %v1310, %v1309
        %v1326 = vpack.c.b16 %v1312, %v1311
        %v1327 = vpack.c.b16 %v1314, %v1313
        %v1328 = vpack.c.b16 %v1316, %v1315
        %v1329 = vpack.c.b16 %v1318, %v1317
        %v1330 = vpack.c.b16 %v1320, %v1319
        %v1331 = vpack.c.b16 %v1322, %v1321
        %v1332 = vpack.c.b16 %v1324, %v1323
        %1341 = vmatprep.subr.bf16.mxu0 0
        %1342 = vmatpush1.bf16.msra.mxu0 %v1173
        %1343 = vmatprep.subr.bf16.mxu0 0
        %1344 = vmatpush1.bf16.msra.mxu0 %v1174
        %1345 = vmatprep.subr.bf16.mxu0 0
        %1346 = vmatpush1.bf16.msra.mxu0 %v1175
        %1347 = vmatprep.subr.bf16.mxu0 0
        %1348 = vmatpush1.bf16.msra.mxu0 %v1176
        %1349 = vmatprep.subr.bf16.mxu0 0
        %1350 = vmatpush1.bf16.msra.mxu0 %v1177
        %1351 = vmatprep.subr.bf16.mxu0 0
        %1352 = vmatpush1.bf16.msra.mxu0 %v1178
        %1353 = vmatprep.subr.bf16.mxu0 0
        %1354 = vmatpush1.bf16.msra.mxu0 %v1179
        %1355 = vmatprep.subr.bf16.mxu0 0
        %1356 = vmatpush1.bf16.msra.mxu0 %v1180
        %1357 = vmatprep.subr.bf16.mxu0 0
        %1358 = vmatpush1.bf16.msra.mxu0 0
        %1359 = vmatprep.subr.bf16.mxu0 0
        %1360 = vmatpush1.bf16.msra.mxu0 0
        %1361 = vmatprep.subr.bf16.mxu0 0
        %1362 = vmatpush1.bf16.msra.mxu0 0
        %1363 = vmatprep.subr.bf16.mxu0 0
        %1364 = vmatpush1.bf16.msra.mxu0 0
        %1365 = vmatprep.subr.bf16.mxu0 0
        %1366 = vmatpush1.bf16.msra.mxu0 0
        %1367 = vmatprep.subr.bf16.mxu0 0
        %1368 = vmatpush1.bf16.msra.mxu0 0
        %1369 = vmatprep.subr.bf16.mxu0 0
        %1370 = vmatpush1.bf16.msra.mxu0 0
        %1371 = vmatprep.subr.bf16.mxu0 0
        %1372 = vmatpush1.bf16.msra.mxu0 0
        %1373 = vmatprep.mubr.bf16.mxu0 0
        %1374 = vmatmul.mubr.bf16.gmra.mrb[0].mxu0 %v1325
        %v1375 = vpop.f32.mrb[0].mxu0
        %v1376 = vadd.f32 %v1216, %v1375
        %v1377 = vpop.f32.mrb[0].mxu0
        %v1378 = vpop.f32.mrb[0].mxu0
        %v1379 = vadd.f32 %v1221, %v1378
        %v1380 = vpop.f32.mrb[0].mxu0
        %1381 = vmatprep.mubr.bf16.mxu0 0
        %1382 = vmatmul.mubr.bf16.gmra.mrb[0].mxu0 %v1326
        %v1383 = vpop.f32.mrb[0].mxu0
        %v1384 = vadd.f32 %v1226, %v1383
        %v1385 = vpop.f32.mrb[0].mxu0
        %v1386 = vpop.f32.mrb[0].mxu0
        %v1387 = vadd.f32 %v1231, %v1386
        %v1388 = vpop.f32.mrb[0].mxu0
        %1389 = vmatprep.mubr.bf16.mxu0 0
        %1390 = vmatmul.mubr.bf16.gmra.mrb[0].mxu0 %v1327
        %v1391 = vpop.f32.mrb[0].mxu0
        %v1392 = vadd.f32 %v1236, %v1391
        %v1393 = vpop.f32.mrb[0].mxu0
        %v1394 = vpop.f32.mrb[0].mxu0
        %v1395 = vadd.f32 %v1241, %v1394
        %v1396 = vpop.f32.mrb[0].mxu0
        %1397 = vmatprep.mubr.bf16.mxu0 0
        %1398 = vmatmul.mubr.bf16.gmra.mrb[0].mxu0 %v1328
        %v1399 = vpop.f32.mrb[0].mxu0
        %v1400 = vadd.f32 %v1246, %v1399
        %v1401 = vpop.f32.mrb[0].mxu0
        %v1402 = vpop.f32.mrb[0].mxu0
        %v1403 = vadd.f32 %v1251, %v1402
        %v1404 = vpop.f32.mrb[0].mxu0
        %1405 = vmatprep.mubr.bf16.mxu0 0
        %1406 = vmatmul.mubr.bf16.gmra.mrb[0].mxu0 %v1329
        %v1407 = vpop.f32.mrb[0].mxu0
        %v1408 = vadd.f32 %v1256, %v1407
        %v1409 = vpop.f32.mrb[0].mxu0
        %v1410 = vpop.f32.mrb[0].mxu0
        %v1411 = vadd.f32 %v1261, %v1410
        %v1412 = vpop.f32.mrb[0].mxu0
        %1413 = vmatprep.mubr.bf16.mxu0 0
        %1414 = vmatmul.mubr.bf16.gmra.mrb[0].mxu0 %v1330
        %v1415 = vpop.f32.mrb[0].mxu0
        %v1416 = vadd.f32 %v1266, %v1415
        %v1417 = vpop.f32.mrb[0].mxu0
        %v1418 = vpop.f32.mrb[0].mxu0
        %v1419 = vadd.f32 %v1271, %v1418
        %v1420 = vpop.f32.mrb[0].mxu0
        %1421 = vmatprep.mubr.bf16.mxu0 0
        %1422 = vmatmul.mubr.bf16.gmra.mrb[0].mxu0 %v1331
        %v1423 = vpop.f32.mrb[0].mxu0
        %v1424 = vadd.f32 %v1276, %v1423
        %v1425 = vpop.f32.mrb[0].mxu0
        %v1426 = vpop.f32.mrb[0].mxu0
        %v1427 = vadd.f32 %v1281, %v1426
        %v1428 = vpop.f32.mrb[0].mxu0
        %1429 = vmatprep.mubr.bf16.mxu0 0
        %1430 = vmatmul.mubr.bf16.gmra.mrb[0].mxu0 %v1332
        %v1431 = vpop.f32.mrb[0].mxu0
        %v1432 = vadd.f32 %v1286, %v1431
        %v1433 = vpop.f32.mrb[0].mxu0
        %v1434 = vpop.f32.mrb[0].mxu0
        %v1435 = vadd.f32 %v1291, %v1434
        %v1436 = vpop.f32.mrb[0].mxu0
        %1437 = vdwg.mxu0
        %v1438 = vmul.f32 %v1376, 0.5
        %v1439 = vmul.f32 %v1379, 0.5
        %v1440 = vmul.f32 %v1384, 0.5
        %v1441 = vmul.f32 %v1387, 0.5
        %v1442 = vmul.f32 %v1392, 0.5
        %v1443 = vmul.f32 %v1395, 0.5
        %v1444 = vmul.f32 %v1400, 0.5
        %v1445 = vmul.f32 %v1403, 0.5
        %v1446 = vmul.f32 %v1408, 0.5
        %v1447 = vmul.f32 %v1411, 0.5
        %v1448 = vmul.f32 %v1416, 0.5
        %v1449 = vmul.f32 %v1419, 0.5
        %v1450 = vmul.f32 %v1424, 0.5
        %v1451 = vmul.f32 %v1427, 0.5
        %v1452 = vmul.f32 %v1432, 0.5
        %v1453 = vmul.f32 %v1435, 0.5
        %v1454 = vtanh.pop %v1438
        %v1455 = vtanh.pop %v1439
        %v1456 = vtanh.pop %v1440
        %v1457 = vtanh.pop %v1441
        %v1458 = vtanh.pop %v1442
        %v1459 = vtanh.pop %v1443
        %v1460 = vtanh.pop %v1444
        %v1461 = vtanh.pop %v1445
        %v1462 = vtanh.pop %v1446
        %v1463 = vtanh.pop %v1447
        %v1464 = vtanh.pop %v1448
        %v1465 = vtanh.pop %v1449
        %v1466 = vtanh.pop %v1450
        %v1467 = vtanh.pop %v1451
        %v1468 = vtanh.pop %v1452
        %v1469 = vtanh.pop %v1453
        %v1470 = vadd.f32 %v1454, 1.0
        %v1471 = vadd.f32 %v1455, 1.0
        %v1472 = vadd.f32 %v1456, 1.0
        %v1473 = vadd.f32 %v1457, 1.0
        %v1474 = vadd.f32 %v1458, 1.0
        %v1475 = vadd.f32 %v1459, 1.0
        %v1476 = vadd.f32 %v1460, 1.0
        %v1477 = vadd.f32 %v1461, 1.0
        %v1478 = vadd.f32 %v1462, 1.0
        %v1479 = vadd.f32 %v1463, 1.0
        %v1480 = vadd.f32 %v1464, 1.0
        %v1481 = vadd.f32 %v1465, 1.0
        %v1482 = vadd.f32 %v1466, 1.0
        %v1483 = vadd.f32 %v1467, 1.0
        %v1484 = vadd.f32 %v1468, 1.0
        %v1485 = vadd.f32 %v1469, 1.0
        %v1486 = vmul.f32 %v1470, 0.5
        %v1487 = vmul.f32 %v1471, 0.5
        %v1488 = vmul.f32 %v1472, 0.5
        %v1489 = vmul.f32 %v1473, 0.5
        %v1490 = vmul.f32 %v1474, 0.5
        %v1491 = vmul.f32 %v1475, 0.5
        %v1492 = vmul.f32 %v1476, 0.5
        %v1493 = vmul.f32 %v1477, 0.5
        %v1494 = vmul.f32 %v1478, 0.5
        %v1495 = vmul.f32 %v1479, 0.5
        %v1496 = vmul.f32 %v1480, 0.5
        %v1497 = vmul.f32 %v1481, 0.5
        %v1498 = vmul.f32 %v1482, 0.5
        %v1499 = vmul.f32 %v1483, 0.5
        %v1500 = vmul.f32 %v1484, 0.5
        %v1501 = vmul.f32 %v1485, 0.5
        %v1502 = vpack.c.bf16 %v1487, %v1486
        %v1503 = vpack.c.bf16 %v1489, %v1488
        %v1504 = vpack.c.bf16 %v1491, %v1490
        %v1505 = vpack.c.bf16 %v1493, %v1492
        %v1506 = vpack.c.bf16 %v1495, %v1494
        %v1507 = vpack.c.bf16 %v1497, %v1496
        %v1508 = vpack.c.bf16 %v1499, %v1498
        %v1509 = vpack.c.bf16 %v1501, %v1500
        %v1510 = vld [vmem:[%s9] sm:$0x1]
        %v1511 = vld [vmem:[#allocation2] sm:$0x1]
        %1513 = vset.pattern.permute.xlu0 0
        %1514 = vperm.xlu0 %1513, %v1511
        %v1515 = vpop.permute.xlu0 %1514
        %v1517 = vlaneseq
        %v1518 = vshrl.u32 %v1517, 7
        %v1519 = vsub.s32 0, %v1518
        %v1520 = vrot.slane %v1515, %v1519
        %1521 = vmatprep.subr.bf16.mxu0 0
        %1522 = vmatpush1.bf16.msra.mxu0 %v1502
        %1523 = vmatprep.subr.bf16.mxu0 0
        %1524 = vmatpush1.bf16.msra.mxu0 %v1503
        %1525 = vmatprep.subr.bf16.mxu0 0
        %1526 = vmatpush1.bf16.msra.mxu0 %v1504
        %1527 = vmatprep.subr.bf16.mxu0 0
        %1528 = vmatpush1.bf16.msra.mxu0 %v1505
        %1529 = vmatprep.subr.bf16.mxu0 0
        %1530 = vmatpush1.bf16.msra.mxu0 %v1506
        %1531 = vmatprep.subr.bf16.mxu0 0
        %1532 = vmatpush1.bf16.msra.mxu0 %v1507
        %1533 = vmatprep.subr.bf16.mxu0 0
        %1534 = vmatpush1.bf16.msra.mxu0 %v1508
        %1535 = vmatprep.subr.bf16.mxu0 0
        %1536 = vmatpush1.bf16.msra.mxu0 %v1509
        %1537 = vmatprep.subr.bf16.mxu0 0
        %1538 = vmatpush1.bf16.msra.mxu0 0
        %1539 = vmatprep.subr.bf16.mxu0 0
        %1540 = vmatpush1.bf16.msra.mxu0 0
        %1541 = vmatprep.subr.bf16.mxu0 0
        %1542 = vmatpush1.bf16.msra.mxu0 0
        %1543 = vmatprep.subr.bf16.mxu0 0
        %1544 = vmatpush1.bf16.msra.mxu0 0
        %1545 = vmatprep.subr.bf16.mxu0 0
        %1546 = vmatpush1.bf16.msra.mxu0 0
        %1547 = vmatprep.subr.bf16.mxu0 0
        %1548 = vmatpush1.bf16.msra.mxu0 0
        %1549 = vmatprep.subr.bf16.mxu0 0
        %1550 = vmatpush1.bf16.msra.mxu0 0
        %1551 = vmatprep.subr.bf16.mxu0 0
        %1552 = vmatpush1.bf16.msra.mxu0 0
        %1553 = vmatprep.mubr.bf16.mxu0 0
        %1554 = vmatmul.mubr.bf16.gmra.mrb[0].mxu0 %v1510
        %v1555 = vpop.f32.mrb[0].mxu0
        %v1556 = vadd.f32 %v1520, %v1555
        %v1557 = vpop.f32.mrb[0].mxu0
        %v1558 = vpop.f32.mrb[0].mxu0
        %v1559 = vpop.f32.mrb[0].mxu0
        %1560 = vdwg.mxu0
        %1561 = vst [vmem:[%s438] sm:$0x1] %v1556
        %s1562 = sand.u32 %s271, 1
        %s1563 = scalar_lea.sflag [#allocation5], %s1562
        %s1564 = sand.u32 %s271, 1
        %s1565 = scalar_lea.vmem [#allocation4], %s1564
        // Predicated region
        $region106: #{tpu_custom_call.1} parent=100 // pred_check
          %p1566 = pneg %p281
        $region107: #{tpu_custom_call.1} parent=100 // pred_check_branch
          %1568 = sbr.rel (%p1566) target = $region109
        $region108: #{tpu_custom_call.1} parent=100 // pred_region
          %s1570 = ssub.s32 16, 16
          %1571 = vsyncadd %s1563, %s1570
          %s1572 = smul.addr %s27, 16
          %s1573 = scalar_lea.hbm %s11, %s1572
          %s1575 = sshll.u32 %s1565, 4
          %s1576 = int_to_ptr.vmem [resolvable:$true] %s1575
          %1578 = dma.vmem_to_hbm [thread:$0]  %s1576, 16, %s1573, %s1563
        $region109: #{tpu_custom_call.1} parent=100 // pred_fallthru
          _
      $region101: #{tpu_custom_call.1} parent=5 // pred_fallthru
        _
      %p1579 = scmp.le.s32.totalorder 2, %s22
      // Predicated region
      $region110: #{tpu_custom_call.1} parent=5 // pred_check
        %p1580 = pneg %p1579
      $region111: #{tpu_custom_call.1} parent=5 // pred_check_branch
        %1582 = sbr.rel (%p1580) target = $region113
      $region112: #{tpu_custom_call.1} parent=5 // pred_region
        %s1583 = ssub.s32 %s22, 2
        // Predicated region
        $region114: #{tpu_custom_call.1} parent=112 // pred_check
          %p1584 = pneg %p287
        $region115: #{tpu_custom_call.1} parent=112 // pred_check_branch
          %1586 = sbr.rel (%p1584) target = $region117
        $region116: #{tpu_custom_call.1} parent=112 // pred_region
          %s1587 = sand.u32 %s272, 1
          %s1588 = scalar_lea.sflag [#allocation5], %s1587
          %s1589 = sand.u32 %s272, 1
          %s1590 = scalar_lea.vmem [#allocation4], %s1589
          %1591 = dma.done %s1588, 16
        $region117: #{tpu_custom_call.1} parent=112 // pred_fallthru
          _
      $region113: #{tpu_custom_call.1} parent=5 // pred_fallthru
        _
    $region6: #{tpu_custom_call.1} parent=1 // loop_footer
      %s26 = sadd.s32 1, %s22
    $region7: #{tpu_custom_call.1} parent=1 // loop_footer_branch
      %21 = sbr.rel target = $region3
    $region8: #{tpu_custom_call.1} parent=1 // loop_exit
      _
    %1592 = vsyncpa [#allocation5], 1
    %s1593 = scalar_lea.sflag [#allocation5], 1
    %1594 = vsyncpa %s1593, 1

</llo_original>
